<compile_context>
chip_gen: v6e
topology: v6e:2x2x1
jax: 0.10.0
libtpu: 0.0.40
codegen_flags: <defaults>
</compile_context>

<pallas_src>
import functools

import jax
import jax.numpy as jnp
import numpy as np
from jax.experimental import pallas as pl
from jax.experimental.pallas import tpu as pltpu


# ----------------------------- Pallas kernel --------------------------------


def _waop_kernel(img_ref, word_ref, pool_ref, wkv_ref, wq_ref, out_ref,
                 *, BB, H, W, C1, N, C2, D):
    f32 = jnp.float32
    HW = H * W

    img = img_ref[...]                                   # [BB, C1, HW] f32
    img_flat = img.reshape(BB * C1, HW)                  # stacked channels-first rows

    # --- Pooling: one stacked matmul for mean-over-W and mean-over-H of every row.
    pool_mat = pool_ref[...]                              # [HW, H+W], pre-scaled
    pools_all = jnp.dot(img_flat, pool_mat, preferred_element_type=f32)   # [BB*C1, H+W]

    # --- Fused word K/V projections: one matmul for all six heads, all BB rows.
    wkv = wkv_ref[...]                                    # [C2+1, 6D]
    wordf = word_ref[...].reshape(BB * N, C2)
    kv_all = (jnp.dot(wordf, wkv[:C2, :], preferred_element_type=f32)
              + wkv[C2:, :])                              # [BB*N, 6D]

    # --- Pre-transposed, pre-scaled q projections (stage i in rows i*D:(i+1)*D).
    wq = wq_ref[...]                                      # [3D, C1+1]
    wq1T, bq1 = wq[0 * D:1 * D, :C1], wq[0 * D:1 * D, C1:]
    wq2T, bq2 = wq[1 * D:2 * D, :C1], wq[1 * D:2 * D, C1:]
    wq3T, bq3 = wq[2 * D:3 * D, :C1], wq[2 * D:3 * D, C1:]

    def softmax0(s):          # softmax over axis 0 (the word axis), f32 in/out
        e = jnp.exp(s - jnp.max(s, axis=0, keepdims=True))
        return e * pl.reciprocal(jnp.sum(e, axis=0, keepdims=True), approx=True)

    # BB is small (<= 8), so the per-row loop is fully unrolled.
    for b in range(BB):
        pools_b = pools_all[b * C1:(b + 1) * C1]          # [C1, H+W]
        ph, pw = pools_b[:, :H], pools_b[:, H:]           # [C1, H], [C1, W]

        kv_b = kv_all[b * N:(b + 1) * N]                  # [N, 6D]
        k1, v1 = kv_b[:, 0 * D:1 * D], kv_b[:, 1 * D:2 * D]
        k2, v2 = kv_b[:, 2 * D:3 * D], kv_b[:, 3 * D:4 * D]
        k3, v3 = kv_b[:, 4 * D:5 * D], kv_b[:, 5 * D:6 * D]

        # --- Stage 1: queries = mean over W (scale folded into wq1/bq1).
        q1T = jnp.dot(wq1T, ph, preferred_element_type=f32) + bq1        # [D, H]
        p1 = softmax0(jnp.dot(k1, q1T, preferred_element_type=f32))      # [N, H]
        add_hT = jnp.dot(jnp.transpose(v1), p1, preferred_element_type=f32)  # [D, H]

        # --- Stage 2: mean over H of (img + bcast_W(add_h))
        #     == pool_w(img) + mean_H(add_h); residual stays the original image.
        pw2 = pw + jnp.mean(add_hT, axis=1, keepdims=True)               # [C1, W]
        q2T = jnp.dot(wq2T, pw2, preferred_element_type=f32) + bq2       # [D, W]
        p2 = softmax0(jnp.dot(k2, q2T, preferred_element_type=f32))      # [N, W]
        add_wT = jnp.dot(jnp.transpose(v2), p2, preferred_element_type=f32)  # [D, W]

        # --- Stage 3 (channels-first): base queries on the raw image, and the
        #     bcast_H(add_w) term folded into a tiled [N, W] score correction.
        q3T = jnp.dot(wq3T, img[b], preferred_element_type=f32) + bq3    # [D, HW]
        s3 = jnp.dot(k3, q3T, preferred_element_type=f32)                # [N, HW]
        corr = jnp.dot(k3, jnp.dot(wq3T, add_wT, preferred_element_type=f32),
                       preferred_element_type=f32)                       # [N, W]
        s3 = s3 + jnp.tile(corr, (1, H))                                 # tile over H
        p3 = softmax0(s3)                                                # [N, HW]
        add_hwT = jnp.dot(jnp.transpose(v3), p3, preferred_element_type=f32)  # [D, HW]

        # Exact f32 residual against the untouched channels-first input.
        out_ref[b] = (img[b] + add_hwT).astype(out_ref.dtype)


# ------------------------------ wrapper --------------------------------------


def _pick_bb(B, row_bytes):
    """Batch rows per grid step: VMEM-budgeted, capped at 8, >= 4 steps if possible."""
    budget = 6 << 20                      # conservative (fits v5e's 16 MiB scoped default)
    cap = int(max(1, min(8, B, budget // max(row_bytes, 1))))
    best = 1
    for bb in range(1, cap + 1):
        if B % bb == 0 and B // bb >= 4:
            best = bb
    return best


def waop_pallas(img_nchw, word, params):
    """img_nchw: [B, C1, H, W] f32, word: [B, N, C2] f32 -> [B, C1, H, W] f32."""
    B, C1, H, W = img_nchw.shape
    _, N, C2 = word.shape
    D = params["wq1"].shape[1]
    assert D == C1, "residual add requires hidden_dim == img_dim"
    HW = H * W
    scale = float(D) ** -0.5
    f32 = jnp.float32

    # Free reshape only (no NCHW<->NHWC transposes, no extra HBM round trips).
    img3 = img_nchw.reshape(B, C1, HW)

    # --- Constant slab 1: pooling one-hots, mean-over-W | mean-over-H, pre-scaled.
    hw = jnp.arange(HW)
    eh = (hw[:, None] // W == jnp.arange(H)[None, :]).astype(f32) * (1.0 / W)   # [HW, H]
    ew = (hw[:, None] % W == jnp.arange(W)[None, :]).astype(f32) * (1.0 / H)    # [HW, W]
    pool_slab = jnp.concatenate([eh, ew], axis=1)                               # [HW, H+W]

    # --- Constant slab 2: fused word K/V projections (weights + bias row).
    kv_w = jnp.concatenate([params["wk1"], params["wv1"], params["wk2"],
                            params["wv2"], params["wk3"], params["wv3"]], axis=1)
    kv_b = jnp.concatenate([params["bk1"], params["bv1"], params["bk2"],
                            params["bv2"], params["bk3"], params["bv3"]], axis=1)
    wkv_slab = jnp.concatenate([kv_w, kv_b], axis=0).astype(f32)                # [C2+1, 6D]

    # --- Constant slab 3: pre-transposed q projections with 1/sqrt(D) folded in,
    #     bias stored as the last column.
    def qblock(i):
        wT = (params[f"wq{i}"] * scale).T                                       # [D, C1]
        bcol = (params[f"bq{i}"] * scale).reshape(D, 1)                         # [D, 1]
        return jnp.concatenate([wT, bcol], axis=1)
    wq_slab = jnp.concatenate([qblock(1), qblock(2), qblock(3)], axis=0).astype(f32)

    # --- Batch blocking: VMEM-budgeted BB, >= 4 grid steps when the batch allows.
    row_bytes = 4 * (2 * C1 * HW + N * C2) * 3
    BB = _pick_bb(B, row_bytes)
    n_blocks = B // BB

    # Explicit scoped-VMEM limit (v7x default scoped is 32 MiB, v5e 16 MiB).
    const_bytes = 4 * (HW * (H + W) + (C2 + 1) * 6 * D + 3 * D * (C1 + 1))
    step_bytes = const_bytes + 4 * 4 * BB * (2 * C1 * HW + N * C2)
    vmem_limit = int(min(32 << 20, max(4 << 20, 8 * step_bytes)))

    kernel = functools.partial(_waop_kernel, BB=BB, H=H, W=W, C1=C1, N=N, C2=C2, D=D)

    out3 = pl.pallas_call(
        kernel,
        out_shape=jax.ShapeDtypeStruct((B, C1, HW), img_nchw.dtype),
        grid_spec=pltpu.PrefetchScalarGridSpec(
            num_scalar_prefetch=0,
            grid=(n_blocks,),
            in_specs=[
                pl.BlockSpec((BB, C1, HW), lambda b: (b, 0, 0)),
                pl.BlockSpec((BB, N, C2), lambda b: (b, 0, 0)),
                pl.BlockSpec((HW, H + W), lambda b: (0, 0)),
                pl.BlockSpec((C2 + 1, 6 * D), lambda b: (0, 0)),
                pl.BlockSpec((3 * D, C1 + 1), lambda b: (0, 0)),
            ],
            out_specs=pl.BlockSpec((BB, C1, HW), lambda b: (b, 0, 0)),
        ),
        compiler_params=pltpu.CompilerParams(
            dimension_semantics=("parallel",),
            vmem_limit_bytes=vmem_limit),
    )(img3, word, pool_slab, wkv_slab, wq_slab)

    return out3.reshape(B, C1, H, W)


# ------------------------- pure-JAX reference --------------------------------


def waop_reference(img, word, p):
    """Direct transcription of the PyTorch forward (word_mask=None), NCHW, f32."""
    B, C1, H, W = img.shape
    D = p["wq1"].shape[1]
    scale = D ** -0.5
    lin = lambda x, w, b: x @ w + b
    sm = lambda x: jax.nn.softmax(x, axis=-1)

    q_h = jnp.mean(img, axis=3).transpose(0, 2, 1)            # [B, H, C1]
    q1 = lin(q_h, p["wq1"], p["bq1"])
    k1 = lin(word, p["wk1"], p["bk1"]); v1 = lin(word, p["wv1"], p["bv1"])
    a1 = sm(scale * jnp.einsum("bhd,bnd->bhn", q1, k1))
    img_H = img + jnp.einsum("bhn,bnd->bhd", a1, v1).transpose(0, 2, 1)[..., None]

    q_w = jnp.mean(img_H, axis=2).transpose(0, 2, 1)          # [B, W, C1]
    q2 = lin(q_w, p["wq2"], p["bq2"])
    k2 = lin(word, p["wk2"], p["bk2"]); v2 = lin(word, p["wv2"], p["bv2"])
    a2 = sm(scale * jnp.einsum("bwd,bnd->bwn", q2, k2))
    img_W = img + jnp.einsum("bwn,bnd->bwd", a2, v2).transpose(0, 2, 1)[:, :, None, :]

    q_hw = img_W.reshape(B, C1, H * W).transpose(0, 2, 1)     # [B, HW, C1]
    q3 = lin(q_hw, p["wq3"], p["bq3"])
    k3 = lin(word, p["wk3"], p["bk3"]); v3 = lin(word, p["wv3"], p["bv3"])
    a3 = sm(scale * jnp.einsum("bqd,bnd->bqn", q3, k3))
    add = jnp.einsum("bqn,bnd->bqd", a3, v3).transpose(0, 2, 1).reshape(B, C1, H, W)
    return img + add


# --------------------------------- main ---------------------------------------


def _init_params(key, img_dim, word_dim, hidden_dim):
    """trunc_normal(std=0.02) weights (stored as [in, out]), zero biases."""
    names_in = {"q": img_dim, "k": word_dim, "v": word_dim}
    params = {}
    for i in (1, 2, 3):
        for kind, in_dim in names_in.items():
            key, sub = jax.random.split(key)
            w = 0.02 * jax.random.truncated_normal(
                sub, -2.0, 2.0, (in_dim, hidden_dim), dtype=jnp.float32)
            params[f"w{kind}{i}"] = w
            params[f"b{kind}{i}"] = jnp.zeros((1, hidden_dim), dtype=jnp.float32)
    return params


if __name__ == "__main__":
    B, C1, H, W = 2, 16, 8, 8      # img_dim = hidden_dim = 16
    N, C2 = 6, 12                  # word_dim = 12

    key = jax.random.PRNGKey(0)
    k_img, k_word, k_par = jax.random.split(key, 3)
    img = jax.random.normal(k_img, (B, C1, H, W), dtype=jnp.float32)
    word = jax.random.normal(k_word, (B, N, C2), dtype=jnp.float32)
    params = _init_params(k_par, img_dim=C1, word_dim=C2, hidden_dim=C1)

    out = jax.block_until_ready(waop_pallas(img, word, params))
    ref = jax.block_until_ready(waop_reference(img, word, params))

    assert out.shape == (B, C1, H, W) and out.dtype == jnp.float32
    np.testing.assert_allclose(np.asarray(out), np.asarray(ref), rtol=1e-2, atol=1e-2)
    print("KERNEL_OK")
</pallas_src>

<mosaic_0001>
module attributes {stable_mosaic.version = 11 : i64} {
  func.func @_waop_kernel(%arg0: i32, %arg1: memref<1x16x64xf32, #tpu.memory_space<vmem>>, %arg2: memref<1x6x12xf32, #tpu.memory_space<vmem>>, %arg3: memref<64x16xf32, #tpu.memory_space<vmem>>, %arg4: memref<13x96xf32, #tpu.memory_space<vmem>>, %arg5: memref<48x17xf32, #tpu.memory_space<vmem>>, %arg6: memref<1x16x64xf32, #tpu.memory_space<vmem>>) attributes {dimension_semantics = [#tpu.dimension_semantics<parallel>], iteration_bounds = array<i64: 2>, scalar_prefetch = 0 : i64, scratch_operands = 0 : i64, tpu.core_type = #tpu.core_type<tc>, window_params = [{transform_indices = @transform_0, window_bounds = array<i64: 1, 16, 64>}, {transform_indices = @transform_1, window_bounds = array<i64: 1, 6, 12>}, {pipeline_mode = #tpu.pipeline_mode<synchronous>, transform_indices = @transform_2, window_bounds = array<i64: 64, 16>}, {pipeline_mode = #tpu.pipeline_mode<synchronous>, transform_indices = @transform_3, window_bounds = array<i64: 13, 96>}, {pipeline_mode = #tpu.pipeline_mode<synchronous>, transform_indices = @transform_4, window_bounds = array<i64: 48, 17>}, {transform_indices = @transform_5, window_bounds = array<i64: 1, 16, 64>}]} {
    %c0 = arith.constant 0 : index
    %c0_0 = arith.constant 0 : index
    %c0_1 = arith.constant 0 : index
    %0 = vector.load %arg1[%c0, %c0_0, %c0_1] : memref<1x16x64xf32, #tpu.memory_space<vmem>>, vector<1x16x64xf32>
    %1 = vector.shape_cast %0 : vector<1x16x64xf32> to vector<16x64xf32>
    %c0_2 = arith.constant 0 : index
    %c0_3 = arith.constant 0 : index
    %2 = vector.load %arg3[%c0_2, %c0_3] : memref<64x16xf32, #tpu.memory_space<vmem>>, vector<64x16xf32>
    %cst = arith.constant dense<0.000000e+00> : vector<16x16xf32>
    %3 = tpu.matmul %1, %2, %cst {dimension_numbers = #tpu.dot_dimension_numbers<[1], [0], [0], [1], [0, 0, 1, 1], [], []>} : vector<16x64xf32>, vector<64x16xf32>, vector<16x16xf32> -> vector<16x16xf32>
    %c0_4 = arith.constant 0 : index
    %c0_5 = arith.constant 0 : index
    %4 = vector.load %arg4[%c0_4, %c0_5] : memref<13x96xf32, #tpu.memory_space<vmem>>, vector<13x96xf32>
    %c0_6 = arith.constant 0 : index
    %c0_7 = arith.constant 0 : index
    %c0_8 = arith.constant 0 : index
    %5 = vector.load %arg2[%c0_6, %c0_7, %c0_8] : memref<1x6x12xf32, #tpu.memory_space<vmem>>, vector<1x6x12xf32>
    %6 = vector.shape_cast %5 : vector<1x6x12xf32> to vector<6x12xf32>
    %7 = vector.extract_strided_slice %4 {offsets = [0, 0], sizes = [12, 96], strides = [1, 1]} : vector<13x96xf32> to vector<12x96xf32>
    %cst_9 = arith.constant dense<0.000000e+00> : vector<6x96xf32>
    %8 = tpu.matmul %6, %7, %cst_9 {dimension_numbers = #tpu.dot_dimension_numbers<[1], [0], [0], [1], [0, 0, 1, 1], [], []>} : vector<6x12xf32>, vector<12x96xf32>, vector<6x96xf32> -> vector<6x96xf32>
    %9 = vector.extract_strided_slice %4 {offsets = [12, 0], sizes = [1, 96], strides = [1, 1]} : vector<13x96xf32> to vector<1x96xf32>
    %10 = vector.broadcast %9 : vector<1x96xf32> to vector<6x96xf32>
    %11 = arith.addf %8, %10 : vector<6x96xf32>
    %c0_10 = arith.constant 0 : index
    %c0_11 = arith.constant 0 : index
    %12 = vector.load %arg5[%c0_10, %c0_11] : memref<48x17xf32, #tpu.memory_space<vmem>>, vector<48x17xf32>
    %13 = vector.extract_strided_slice %12 {offsets = [0, 0], sizes = [16, 16], strides = [1, 1]} : vector<48x17xf32> to vector<16x16xf32>
    %14 = vector.extract_strided_slice %12 {offsets = [0, 16], sizes = [16, 1], strides = [1, 1]} : vector<48x17xf32> to vector<16x1xf32>
    %15 = vector.extract_strided_slice %12 {offsets = [16, 0], sizes = [16, 16], strides = [1, 1]} : vector<48x17xf32> to vector<16x16xf32>
    %16 = vector.extract_strided_slice %12 {offsets = [16, 16], sizes = [16, 1], strides = [1, 1]} : vector<48x17xf32> to vector<16x1xf32>
    %17 = vector.extract_strided_slice %12 {offsets = [32, 0], sizes = [16, 16], strides = [1, 1]} : vector<48x17xf32> to vector<16x16xf32>
    %18 = vector.extract_strided_slice %12 {offsets = [32, 16], sizes = [16, 1], strides = [1, 1]} : vector<48x17xf32> to vector<16x1xf32>
    %19 = vector.extract_strided_slice %3 {offsets = [0, 0], sizes = [16, 8], strides = [1, 1]} : vector<16x16xf32> to vector<16x8xf32>
    %20 = vector.extract_strided_slice %3 {offsets = [0, 8], sizes = [16, 8], strides = [1, 1]} : vector<16x16xf32> to vector<16x8xf32>
    %21 = vector.extract_strided_slice %11 {offsets = [0, 0], sizes = [6, 16], strides = [1, 1]} : vector<6x96xf32> to vector<6x16xf32>
    %22 = vector.extract_strided_slice %11 {offsets = [0, 16], sizes = [6, 16], strides = [1, 1]} : vector<6x96xf32> to vector<6x16xf32>
    %23 = vector.extract_strided_slice %11 {offsets = [0, 32], sizes = [6, 16], strides = [1, 1]} : vector<6x96xf32> to vector<6x16xf32>
    %24 = vector.extract_strided_slice %11 {offsets = [0, 48], sizes = [6, 16], strides = [1, 1]} : vector<6x96xf32> to vector<6x16xf32>
    %25 = vector.extract_strided_slice %11 {offsets = [0, 64], sizes = [6, 16], strides = [1, 1]} : vector<6x96xf32> to vector<6x16xf32>
    %26 = vector.extract_strided_slice %11 {offsets = [0, 80], sizes = [6, 16], strides = [1, 1]} : vector<6x96xf32> to vector<6x16xf32>
    %cst_12 = arith.constant dense<0.000000e+00> : vector<16x8xf32>
    %27 = tpu.matmul %13, %19, %cst_12 {dimension_numbers = #tpu.dot_dimension_numbers<[1], [0], [0], [1], [0, 0, 1, 1], [], []>} : vector<16x16xf32>, vector<16x8xf32>, vector<16x8xf32> -> vector<16x8xf32>
    %28 = vector.broadcast %14 : vector<16x1xf32> to vector<16x8xf32>
    %29 = arith.addf %27, %28 : vector<16x8xf32>
    %cst_13 = arith.constant dense<0.000000e+00> : vector<6x8xf32>
    %30 = tpu.matmul %21, %29, %cst_13 {dimension_numbers = #tpu.dot_dimension_numbers<[1], [0], [0], [1], [0, 0, 1, 1], [], []>} : vector<6x16xf32>, vector<16x8xf32>, vector<6x8xf32> -> vector<6x8xf32>
    %cst_14 = arith.constant dense<0xFF800000> : vector<8xf32>
    %31 = vector.multi_reduction <maximumf>, %30, %cst_14 [0] : vector<6x8xf32> to vector<8xf32>
    %32 = vector.shape_cast %31 : vector<8xf32> to vector<1x8xf32>
    %33 = vector.broadcast %32 : vector<1x8xf32> to vector<6x8xf32>
    %34 = arith.subf %30, %33 : vector<6x8xf32>
    %35 = math.exp %34 : vector<6x8xf32>
    %cst_15 = arith.constant dense<0.000000e+00> : vector<8xf32>
    %36 = vector.multi_reduction <add>, %35, %cst_15 [0] : vector<6x8xf32> to vector<8xf32>
    %37 = vector.shape_cast %36 : vector<8xf32> to vector<1x8xf32>
    %38 = tpu.reciprocal %37 {approx = true} : vector<1x8xf32> -> vector<1x8xf32>
    %39 = vector.broadcast %38 : vector<1x8xf32> to vector<6x8xf32>
    %40 = arith.mulf %35, %39 : vector<6x8xf32>
    %41 = tpu.transpose %22, [1, 0] : vector<6x16xf32> -> vector<16x6xf32>
    %cst_16 = arith.constant dense<0.000000e+00> : vector<16x8xf32>
    %42 = tpu.matmul %41, %40, %cst_16 {dimension_numbers = #tpu.dot_dimension_numbers<[1], [0], [0], [1], [0, 0, 1, 1], [], []>} : vector<16x6xf32>, vector<6x8xf32>, vector<16x8xf32> -> vector<16x8xf32>
    %cst_17 = arith.constant dense<0.000000e+00> : vector<16xf32>
    %43 = vector.multi_reduction <add>, %42, %cst_17 [1] : vector<16x8xf32> to vector<16xf32>
    %44 = vector.shape_cast %43 : vector<16xf32> to vector<16x1xf32>
    %cst_18 = arith.constant 8.000000e+00 : f32
    %45 = vector.broadcast %cst_18 : f32 to vector<16x1xf32>
    %46 = arith.divf %44, %45 : vector<16x1xf32>
    %47 = vector.broadcast %46 : vector<16x1xf32> to vector<16x8xf32>
    %48 = arith.addf %20, %47 : vector<16x8xf32>
    %cst_19 = arith.constant dense<0.000000e+00> : vector<16x8xf32>
    %49 = tpu.matmul %15, %48, %cst_19 {dimension_numbers = #tpu.dot_dimension_numbers<[1], [0], [0], [1], [0, 0, 1, 1], [], []>} : vector<16x16xf32>, vector<16x8xf32>, vector<16x8xf32> -> vector<16x8xf32>
    %50 = vector.broadcast %16 : vector<16x1xf32> to vector<16x8xf32>
    %51 = arith.addf %49, %50 : vector<16x8xf32>
    %cst_20 = arith.constant dense<0.000000e+00> : vector<6x8xf32>
    %52 = tpu.matmul %23, %51, %cst_20 {dimension_numbers = #tpu.dot_dimension_numbers<[1], [0], [0], [1], [0, 0, 1, 1], [], []>} : vector<6x16xf32>, vector<16x8xf32>, vector<6x8xf32> -> vector<6x8xf32>
    %cst_21 = arith.constant dense<0xFF800000> : vector<8xf32>
    %53 = vector.multi_reduction <maximumf>, %52, %cst_21 [0] : vector<6x8xf32> to vector<8xf32>
    %54 = vector.shape_cast %53 : vector<8xf32> to vector<1x8xf32>
    %55 = vector.broadcast %54 : vector<1x8xf32> to vector<6x8xf32>
    %56 = arith.subf %52, %55 : vector<6x8xf32>
    %57 = math.exp %56 : vector<6x8xf32>
    %cst_22 = arith.constant dense<0.000000e+00> : vector<8xf32>
    %58 = vector.multi_reduction <add>, %57, %cst_22 [0] : vector<6x8xf32> to vector<8xf32>
    %59 = vector.shape_cast %58 : vector<8xf32> to vector<1x8xf32>
    %60 = tpu.reciprocal %59 {approx = true} : vector<1x8xf32> -> vector<1x8xf32>
    %61 = vector.broadcast %60 : vector<1x8xf32> to vector<6x8xf32>
    %62 = arith.mulf %57, %61 : vector<6x8xf32>
    %63 = tpu.transpose %24, [1, 0] : vector<6x16xf32> -> vector<16x6xf32>
    %cst_23 = arith.constant dense<0.000000e+00> : vector<16x8xf32>
    %64 = tpu.matmul %63, %62, %cst_23 {dimension_numbers = #tpu.dot_dimension_numbers<[1], [0], [0], [1], [0, 0, 1, 1], [], []>} : vector<16x6xf32>, vector<6x8xf32>, vector<16x8xf32> -> vector<16x8xf32>
    %65 = vector.shape_cast %0 : vector<1x16x64xf32> to vector<16x64xf32>
    %cst_24 = arith.constant dense<0.000000e+00> : vector<16x64xf32>
    %66 = tpu.matmul %17, %65, %cst_24 {dimension_numbers = #tpu.dot_dimension_numbers<[1], [0], [0], [1], [0, 0, 1, 1], [], []>} : vector<16x16xf32>, vector<16x64xf32>, vector<16x64xf32> -> vector<16x64xf32>
    %67 = vector.broadcast %18 : vector<16x1xf32> to vector<16x64xf32>
    %68 = arith.addf %66, %67 : vector<16x64xf32>
    %cst_25 = arith.constant dense<0.000000e+00> : vector<6x64xf32>
    %69 = tpu.matmul %25, %68, %cst_25 {dimension_numbers = #tpu.dot_dimension_numbers<[1], [0], [0], [1], [0, 0, 1, 1], [], []>} : vector<6x16xf32>, vector<16x64xf32>, vector<6x64xf32> -> vector<6x64xf32>
    %cst_26 = arith.constant dense<0.000000e+00> : vector<16x8xf32>
    %70 = tpu.matmul %17, %64, %cst_26 {dimension_numbers = #tpu.dot_dimension_numbers<[1], [0], [0], [1], [0, 0, 1, 1], [], []>} : vector<16x16xf32>, vector<16x8xf32>, vector<16x8xf32> -> vector<16x8xf32>
    %cst_27 = arith.constant dense<0.000000e+00> : vector<6x8xf32>
    %71 = tpu.matmul %25, %70, %cst_27 {dimension_numbers = #tpu.dot_dimension_numbers<[1], [0], [0], [1], [0, 0, 1, 1], [], []>} : vector<6x16xf32>, vector<16x8xf32>, vector<6x8xf32> -> vector<6x8xf32>
    %72 = tpu.concatenate %71, %71, %71, %71, %71, %71, %71, %71 in 1 : vector<6x8xf32>, vector<6x8xf32>, vector<6x8xf32>, vector<6x8xf32>, vector<6x8xf32>, vector<6x8xf32>, vector<6x8xf32>, vector<6x8xf32> -> vector<6x64xf32>
    %73 = arith.addf %69, %72 : vector<6x64xf32>
    %cst_28 = arith.constant dense<0xFF800000> : vector<64xf32>
    %74 = vector.multi_reduction <maximumf>, %73, %cst_28 [0] : vector<6x64xf32> to vector<64xf32>
    %75 = vector.shape_cast %74 : vector<64xf32> to vector<1x64xf32>
    %76 = vector.broadcast %75 : vector<1x64xf32> to vector<6x64xf32>
    %77 = arith.subf %73, %76 : vector<6x64xf32>
    %78 = math.exp %77 : vector<6x64xf32>
    %cst_29 = arith.constant dense<0.000000e+00> : vector<64xf32>
    %79 = vector.multi_reduction <add>, %78, %cst_29 [0] : vector<6x64xf32> to vector<64xf32>
    %80 = vector.shape_cast %79 : vector<64xf32> to vector<1x64xf32>
    %81 = tpu.reciprocal %80 {approx = true} : vector<1x64xf32> -> vector<1x64xf32>
    %82 = vector.broadcast %81 : vector<1x64xf32> to vector<6x64xf32>
    %83 = arith.mulf %78, %82 : vector<6x64xf32>
    %84 = tpu.transpose %26, [1, 0] : vector<6x16xf32> -> vector<16x6xf32>
    %cst_30 = arith.constant dense<0.000000e+00> : vector<16x64xf32>
    %85 = tpu.matmul %84, %83, %cst_30 {dimension_numbers = #tpu.dot_dimension_numbers<[1], [0], [0], [1], [0, 0, 1, 1], [], []>} : vector<16x6xf32>, vector<6x64xf32>, vector<16x64xf32> -> vector<16x64xf32>
    %86 = vector.shape_cast %0 : vector<1x16x64xf32> to vector<16x64xf32>
    %87 = arith.addf %86, %85 : vector<16x64xf32>
    %c0_31 = arith.constant 0 : index
    %c0_32 = arith.constant 0 : index
    %c0_33 = arith.constant 0 : index
    %88 = vector.load %arg6[%c0_31, %c0_32, %c0_33] : memref<1x16x64xf32, #tpu.memory_space<vmem>>, vector<1x16x64xf32>
    %89 = vector.shape_cast %88 : vector<1x16x64xf32> to vector<16x64xf32>
    %90 = vector.shape_cast %87 : vector<16x64xf32> to vector<1x16x64xf32>
    tpu.vector_store %arg6[%c0_31, %c0_32, %c0_33], %90 {strides = array<i32>} : memref<1x16x64xf32, #tpu.memory_space<vmem>>, vector<1x16x64xf32>,
    return
  }
  func.func @transform_0(%arg0: i32) -> (i32, i32, i32) {
    %c0_i32 = arith.constant 0 : i32
    %c0_i32_0 = arith.constant 0 : i32
    %c0_i32_1 = arith.constant 0 : i32
    return %arg0, %c0_i32, %c0_i32_0 : i32, i32, i32
  }
  func.func @transform_1(%arg0: i32) -> (i32, i32, i32) {
    %c0_i32 = arith.constant 0 : i32
    %c0_i32_0 = arith.constant 0 : i32
    %c0_i32_1 = arith.constant 0 : i32
    return %arg0, %c0_i32, %c0_i32_0 : i32, i32, i32
  }
  func.func @transform_2(%arg0: i32) -> (i32, i32) {
    %c0_i32 = arith.constant 0 : i32
    %c0_i32_0 = arith.constant 0 : i32
    %c0_i32_1 = arith.constant 0 : i32
    return %c0_i32, %c0_i32_0 : i32, i32
  }
  func.func @transform_3(%arg0: i32) -> (i32, i32) {
    %c0_i32 = arith.constant 0 : i32
    %c0_i32_0 = arith.constant 0 : i32
    %c0_i32_1 = arith.constant 0 : i32
    return %c0_i32, %c0_i32_0 : i32, i32
  }
  func.func @transform_4(%arg0: i32) -> (i32, i32) {
    %c0_i32 = arith.constant 0 : i32
    %c0_i32_0 = arith.constant 0 : i32
    %c0_i32_1 = arith.constant 0 : i32
    return %c0_i32, %c0_i32_0 : i32, i32
  }
  func.func @transform_5(%arg0: i32) -> (i32, i32, i32) {
    %c0_i32 = arith.constant 0 : i32
    %c0_i32_0 = arith.constant 0 : i32
    %c0_i32_1 = arith.constant 0 : i32
    return %arg0, %c0_i32, %c0_i32_0 : i32, i32, i32
  }
}

</mosaic_0001>

<llo_original>
// kernel: tpu_custom_call.1
$region0: #{tpu_custom_call.1}
  #allocation0 [shape = 'u32[]', space=smem, size = 0x4, offset = 0x4, fixed_abs, tag = 'smem constant byte address 0x4 - core index']
  #allocation1 [shape = 'u32[144,128]{1,0:T(1,128)}', space=vmem, size = 0x12000, scoped, tag = 'internal scratch']
  %s0 = inlined_call_operand.vmem [shape: f32[2,16,64], index: 0, kind: input, shape index: {}]
  %s1 = inlined_call_operand.vmem [shape: f32[2,6,12], index: 1, kind: input, shape index: {}]
  %s2 = inlined_call_operand.vmem [shape: f32[64,16], index: 2, kind: input, shape index: {}]
  %s3 = inlined_call_operand.vmem [shape: f32[13,96], index: 3, kind: input, shape index: {}]
  %s4 = inlined_call_operand.vmem [shape: f32[48,17], index: 4, kind: input, shape index: {}]
  %s5 = inlined_call_operand.hbm [shape: f32[2,16,64], index: 5, kind: output, shape index: {}]
  %s6 = sld [smem:[#allocation0]]
  $region53: #{tpu_custom_call.1} parent=0
    _
  %s8 = ssub.s32 1, %s6
  %s9 = scalar_select 0, %s8, %s6
  $region1: #{tpu_custom_call.1} parent=0
    #allocation2 [shape = 'u8[16384]{0}', space=vmem, size = 0x4000, scoped, tag = 'output window, operand 0']
    #allocation3 [shape = 's32[2]{0}', space=sflag, size = 0x8, scoped, tag = 'scoped memory for tpu_custom_call.1']
    %10 = vsyncpa [#allocation3], 0
    %s11 = scalar_lea.sflag [#allocation3], 1
    %12 = vsyncpa %s11, 0
    loop: start=0, step=1, limit=4
    $region2: #{tpu_custom_call.1} parent=1 // loop_pre_header
      _
    $region3: #{tpu_custom_call.1} parent=1 // loop_header
      %s14 = sphi 0, %s18
      %p15 = scmp.ge.s32.totalorder %s14, 4
      %s24 = sphi 0, %s26
      %s27 = sphi 0, %s24
      %s28 = sphi 0, %s27
      %s44 = sphi 0, %s28
      %s50 = sphi 0, %s52
      %s53 = sphi 0, %s50
      %s54 = sphi 0, %s53
      %s70 = sphi 0, %s54
      %s74 = sphi 0, %s74
      %s76 = sphi 0, %s74
      %s77 = sphi 0, %s76
      %s91 = sphi 0, %s77
      %s95 = sphi 0, %s95
      %s97 = sphi 0, %s95
      %s98 = sphi 0, %s97
      %s112 = sphi 0, %s98
      %s116 = sphi 0, %s116
      %s118 = sphi 0, %s116
      %s119 = sphi 0, %s118
      %s133 = sphi 0, %s119
      %s139 = sphi 0, %s141
      %s142 = sphi 0, %s139
      %s143 = sphi 0, %s142
      %s159 = sphi 0, %s143
    $region4: #{tpu_custom_call.1} parent=1 // loop_header_branch
      %17 = sbr.rel (%p15) target = $region8
    $region5: #{tpu_custom_call.1} parent=1 // loop_body
      %s19 = ssub.s32 %s14, 1
      %s20 = ssub.s32 %s14, 2
      %s21 = sadd.s32 %s14, 1
      %s22 = ssub.s32 %s14, %s21
      %p23 = scmp.eq.s32.totalorder %s22, 0
      %s25 = sadd.s32 %s24, 1
      %s26 = scalar_select %p23, %s24, %s25
      %p29 = pneg %p23
      %p30 = scmp.eq.s32.totalorder %s14, 1
      %p31 = por %p29, %p30
      %p32 = scmp.ne.s32.totalorder %s24, %s27
      %p33 = scmp.eq.s32.totalorder %s14, 0
      %p34 = por %p32, %p33
      %p35 = scmp.ne.s32.totalorder %s24, %s27
      %p36 = scmp.eq.s32.totalorder %s19, 1
      %p37 = por %p35, %p36
      %p38 = scmp.ne.s32.totalorder %s27, %s28
      %p39 = scmp.eq.s32.totalorder %s19, 0
      %p40 = por %p38, %p39
      %p41 = scmp.ne.s32.totalorder %s27, %s28
      %p42 = scmp.eq.s32.totalorder %s20, 1
      %p43 = por %p41, %p42
      %p45 = scmp.ne.s32.totalorder %s28, %s44
      %p46 = scmp.eq.s32.totalorder %s20, 0
      %p47 = por %p45, %p46
      %s48 = ssub.s32 %s14, %s21
      %p49 = scmp.eq.s32.totalorder %s48, 0
      %s51 = sadd.s32 %s50, 1
      %s52 = scalar_select %p49, %s50, %s51
      %p55 = pneg %p49
      %p56 = scmp.eq.s32.totalorder %s14, 1
      %p57 = por %p55, %p56
      %p58 = scmp.ne.s32.totalorder %s50, %s53
      %p59 = scmp.eq.s32.totalorder %s14, 0
      %p60 = por %p58, %p59
      %p61 = scmp.ne.s32.totalorder %s50, %s53
      %p62 = scmp.eq.s32.totalorder %s19, 1
      %p63 = por %p61, %p62
      %p64 = scmp.ne.s32.totalorder %s53, %s54
      %p65 = scmp.eq.s32.totalorder %s19, 0
      %p66 = por %p64, %p65
      %p67 = scmp.ne.s32.totalorder %s53, %s54
      %p68 = scmp.eq.s32.totalorder %s20, 1
      %p69 = por %p67, %p68
      %p71 = scmp.ne.s32.totalorder %s54, %s70
      %p72 = scmp.eq.s32.totalorder %s20, 0
      %p73 = por %p71, %p72
      %s75 = sadd.s32 %s74, 1
      %p78 = scmp.eq.s32.totalorder %s14, 1
      %p79 = scmp.ne.s32.totalorder %s74, %s76
      %p80 = scmp.eq.s32.totalorder %s14, 0
      %p81 = por %p79, %p80
      %p82 = scmp.ne.s32.totalorder %s74, %s76
      %p83 = scmp.eq.s32.totalorder %s19, 1
      %p84 = por %p82, %p83
      %p85 = scmp.ne.s32.totalorder %s76, %s77
      %p86 = scmp.eq.s32.totalorder %s19, 0
      %p87 = por %p85, %p86
      %p88 = scmp.ne.s32.totalorder %s76, %s77
      %p89 = scmp.eq.s32.totalorder %s20, 1
      %p90 = por %p88, %p89
      %p92 = scmp.ne.s32.totalorder %s77, %s91
      %p93 = scmp.eq.s32.totalorder %s20, 0
      %p94 = por %p92, %p93
      %s96 = sadd.s32 %s95, 1
      %p99 = scmp.eq.s32.totalorder %s14, 1
      %p100 = scmp.ne.s32.totalorder %s95, %s97
      %p101 = scmp.eq.s32.totalorder %s14, 0
      %p102 = por %p100, %p101
      %p103 = scmp.ne.s32.totalorder %s95, %s97
      %p104 = scmp.eq.s32.totalorder %s19, 1
      %p105 = por %p103, %p104
      %p106 = scmp.ne.s32.totalorder %s97, %s98
      %p107 = scmp.eq.s32.totalorder %s19, 0
      %p108 = por %p106, %p107
      %p109 = scmp.ne.s32.totalorder %s97, %s98
      %p110 = scmp.eq.s32.totalorder %s20, 1
      %p111 = por %p109, %p110
      %p113 = scmp.ne.s32.totalorder %s98, %s112
      %p114 = scmp.eq.s32.totalorder %s20, 0
      %p115 = por %p113, %p114
      %s117 = sadd.s32 %s116, 1
      %p120 = scmp.eq.s32.totalorder %s14, 1
      %p121 = scmp.ne.s32.totalorder %s116, %s118
      %p122 = scmp.eq.s32.totalorder %s14, 0
      %p123 = por %p121, %p122
      %p124 = scmp.ne.s32.totalorder %s116, %s118
      %p125 = scmp.eq.s32.totalorder %s19, 1
      %p126 = por %p124, %p125
      %p127 = scmp.ne.s32.totalorder %s118, %s119
      %p128 = scmp.eq.s32.totalorder %s19, 0
      %p129 = por %p127, %p128
      %p130 = scmp.ne.s32.totalorder %s118, %s119
      %p131 = scmp.eq.s32.totalorder %s20, 1
      %p132 = por %p130, %p131
      %p134 = scmp.ne.s32.totalorder %s119, %s133
      %p135 = scmp.eq.s32.totalorder %s20, 0
      %p136 = por %p134, %p135
      %s137 = ssub.s32 %s14, %s21
      %p138 = scmp.eq.s32.totalorder %s137, 0
      %s140 = sadd.s32 %s139, 1
      %s141 = scalar_select %p138, %s139, %s140
      %p144 = pneg %p138
      %p145 = scmp.eq.s32.totalorder %s14, 1
      %p146 = por %p144, %p145
      %p147 = scmp.ne.s32.totalorder %s139, %s142
      %p148 = scmp.eq.s32.totalorder %s14, 0
      %p149 = por %p147, %p148
      %p150 = scmp.ne.s32.totalorder %s139, %s142
      %p151 = scmp.eq.s32.totalorder %s19, 1
      %p152 = por %p150, %p151
      %p153 = scmp.ne.s32.totalorder %s142, %s143
      %p154 = scmp.eq.s32.totalorder %s19, 0
      %p155 = por %p153, %p154
      %p156 = scmp.ne.s32.totalorder %s142, %s143
      %p157 = scmp.eq.s32.totalorder %s20, 1
      %p158 = por %p156, %p157
      %p160 = scmp.ne.s32.totalorder %s143, %s159
      %p161 = scmp.eq.s32.totalorder %s20, 0
      %p162 = por %p160, %p161
      %p163 = scmp.le.s32.totalorder 1, %s14
      %p164 = scmp.lt.s32.totalorder %s14, 3
      %p165 = pnand %p163, %p164
      %p166 = pneg %p165
      // Predicated region
      $region9: #{tpu_custom_call.1} parent=5 // pred_check
        _
      $region10: #{tpu_custom_call.1} parent=5 // pred_check_branch
        %168 = sbr.rel (%p165) target = $region12
      $region11: #{tpu_custom_call.1} parent=5 // pred_region
        %s169 = ssub.s32 %s14, 1
        // Predicated region
        $region13: #{tpu_custom_call.1} parent=11 // pred_check
          %p170 = pneg %p87
        $region14: #{tpu_custom_call.1} parent=11 // pred_check_branch
          %172 = sbr.rel (%p170) target = $region16
        $region15: #{tpu_custom_call.1} parent=11 // pred_region
          _
        $region16: #{tpu_custom_call.1} parent=11 // pred_fallthru
          _
        // Predicated region
        $region17: #{tpu_custom_call.1} parent=11 // pred_check
          %p173 = pneg %p108
        $region18: #{tpu_custom_call.1} parent=11 // pred_check_branch
          %175 = sbr.rel (%p173) target = $region20
        $region19: #{tpu_custom_call.1} parent=11 // pred_region
          _
        $region20: #{tpu_custom_call.1} parent=11 // pred_fallthru
          _
        // Predicated region
        $region21: #{tpu_custom_call.1} parent=11 // pred_check
          %p176 = pneg %p129
        $region22: #{tpu_custom_call.1} parent=11 // pred_check_branch
          %178 = sbr.rel (%p176) target = $region24
        $region23: #{tpu_custom_call.1} parent=11 // pred_region
          _
        $region24: #{tpu_custom_call.1} parent=11 // pred_fallthru
          _
      $region12: #{tpu_custom_call.1} parent=5 // pred_fallthru
        _
      %p179 = scmp.lt.s32.totalorder %s14, 2
      // Predicated region
      $region25: #{tpu_custom_call.1} parent=5 // pred_check
        %p180 = pneg %p179
      $region26: #{tpu_custom_call.1} parent=5 // pred_check_branch
        %182 = sbr.rel (%p180) target = $region28
      $region27: #{tpu_custom_call.1} parent=5 // pred_region
        // Predicated region
        $region29: #{tpu_custom_call.1} parent=27 // pred_check
          %p183 = pneg %p34
        $region30: #{tpu_custom_call.1} parent=27 // pred_check_branch
          %185 = sbr.rel (%p183) target = $region32
        $region31: #{tpu_custom_call.1} parent=27 // pred_region
          %p186 = scmp.lt.s32.totalorder %s14, 1
          %s187 = scalar_select %p186, %s14, 1
          %s188 = smul.addr %s187, 2
          %s189 = smul.addr %s188, 8
          %s190 = scalar_lea.vmem %s0, %s189
        $region32: #{tpu_custom_call.1} parent=27 // pred_fallthru
          _
        // Predicated region
        $region33: #{tpu_custom_call.1} parent=27 // pred_check
          %p191 = pneg %p60
        $region34: #{tpu_custom_call.1} parent=27 // pred_check_branch
          %193 = sbr.rel (%p191) target = $region36
        $region35: #{tpu_custom_call.1} parent=27 // pred_region
          %p194 = scmp.lt.s32.totalorder %s14, 1
          %s195 = scalar_select %p194, %s14, 1
          %s196 = smul.addr %s195, 8
          %s197 = scalar_lea.vmem %s1, %s196
        $region36: #{tpu_custom_call.1} parent=27 // pred_fallthru
          _
      $region28: #{tpu_custom_call.1} parent=5 // pred_fallthru
        _
      %p198 = scmp.le.s32.totalorder 1, %s14
      %p199 = scmp.lt.s32.totalorder %s14, 3
      %p200 = pnand %p198, %p199
      %p201 = pneg %p200
      // Predicated region
      $region37: #{tpu_custom_call.1} parent=5 // pred_check
        _
      $region38: #{tpu_custom_call.1} parent=5 // pred_check_branch
        %203 = sbr.rel (%p200) target = $region40
      $region39: #{tpu_custom_call.1} parent=5 // pred_region
        %s204 = ssub.s32 %s14, 1
        %p205 = scmp.lt.s32.totalorder %s19, 1
        %s206 = scalar_select %p205, %s19, 1
        %s207 = smul.addr %s206, 2
        %s208 = smul.addr %s207, 8
        %s209 = scalar_lea.vmem %s0, %s208
        %p210 = pneg %p40
        %p211 = pneg %p37
        %p212 = scmp.lt.s32.totalorder %s19, 1
        %s213 = scalar_select %p212, %s19, 1
        %s214 = smul.addr %s213, 8
        %s215 = scalar_lea.vmem %s1, %s214
        %p216 = pneg %p66
        %p217 = pneg %p63
        %p218 = pneg %p87
        %p219 = pneg %p84
        %p220 = pneg %p108
        %p221 = pneg %p105
        %p222 = pneg %p129
        %p223 = pneg %p126
        %p224 = pneg %p155
        %p225 = pneg %p152
        %s226 = sand.u32 %s142, 1
        %s227 = scalar_lea.sflag [#allocation3], %s226
        %s228 = sand.u32 %s142, 1
        %s229 = smul.addr %s228, 16
        %s230 = scalar_lea.vmem [#allocation2], %s229
        %p231 = scmp.lt.s32.totalorder %s19, 1
        %s232 = scalar_select %p231, %s19, 1
        %s233 = smul.addr %s232, 2
        %s234 = smul.addr %s233, 8
        %s235 = scalar_lea.vmem %s0, %s234
        %p236 = scmp.lt.s32.totalorder %s19, 1
        %s237 = scalar_select %p236, %s19, 1
        %s238 = smul.addr %s237, 8
        %s239 = scalar_lea.vmem %s1, %s238
        %v240 = vld [vmem:[%s235] sm:$0xff]
        %v241 = vld [vmem:[%s235 + $0x8] sm:$0xff]
        %v242 = vld [vmem:[%s2] sm:$0xff]
        %v243 = vld [vmem:[%s2 + $0x8] sm:$0xff]
        %v244 = vld [vmem:[%s2 + $0x10] sm:$0xff]
        %v245 = vld [vmem:[%s2 + $0x18] sm:$0xff]
        %v246 = vld [vmem:[%s2 + $0x20] sm:$0xff]
        %v247 = vld [vmem:[%s2 + $0x28] sm:$0xff]
        %v248 = vld [vmem:[%s2 + $0x30] sm:$0xff]
        %v249 = vld [vmem:[%s2 + $0x38] sm:$0xff]
        %vm250 = vcmask 523264
        %v252 = vsel %vm250, %v240, 0
        %v255 = vsel %vm250, %v241, 0
        %257 = vmatprep.subr.mxu0 0.0
        %258 = vmatpush1.msra.mxu0 0.0
        %259 = vmatprep.subr.mxu0 0.0
        %260 = vmatpush1.msra.mxu0 0.0
        %261 = vmatprep.subr.mxu0 0.0
        %262 = vmatpush1.msra.mxu0 0.0
        %263 = vmatprep.subr.mxu0 0.0
        %264 = vmatpush1.msra.mxu0 0.0
        %265 = vmatprep.subr.mxu0 0.0
        %266 = vmatpush1.msra.mxu0 0.0
        %267 = vmatprep.subr.mxu0 0.0
        %268 = vmatpush1.msra.mxu0 0.0
        %269 = vmatprep.subr.mxu0 0.0
        %270 = vmatpush1.msra.mxu0 0.0
        %271 = vmatprep.subr.mxu0 0.0
        %272 = vmatpush1.msra.mxu0 0.0
        %273 = vmatprep.subr.mxu0 0.0
        %274 = vmatpush1.msra.mxu0 %v249
        %275 = vmatprep.subr.mxu0 0.0
        %276 = vmatpush1.msra.mxu0 %v248
        %277 = vmatprep.subr.mxu0 0.0
        %278 = vmatpush1.msra.mxu0 %v247
        %279 = vmatprep.subr.mxu0 0.0
        %280 = vmatpush1.msra.mxu0 %v246
        %281 = vmatprep.subr.mxu0 0.0
        %282 = vmatpush1.msra.mxu0 %v245
        %283 = vmatprep.subr.mxu0 0.0
        %284 = vmatpush1.msra.mxu0 %v244
        %285 = vmatprep.subr.mxu0 0.0
        %286 = vmatpush1.msra.mxu0 %v243
        %287 = vmatprep.subr.mxu0 0.0
        %288 = vmatpush1.msra.mxu0 %v242
        %289 = vmatprep.subr.mxu0 0.0
        %290 = vmatpush2.msra.mxu0 0.0
        %291 = vmatprep.subr.mxu0 0.0
        %292 = vmatpush2.msra.mxu0 0.0
        %293 = vmatprep.subr.mxu0 0.0
        %294 = vmatpush2.msra.mxu0 0.0
        %295 = vmatprep.subr.mxu0 0.0
        %296 = vmatpush2.msra.mxu0 0.0
        %297 = vmatprep.subr.mxu0 0.0
        %298 = vmatpush2.msra.mxu0 0.0
        %299 = vmatprep.subr.mxu0 0.0
        %300 = vmatpush2.msra.mxu0 0.0
        %301 = vmatprep.subr.mxu0 0.0
        %302 = vmatpush2.msra.mxu0 0.0
        %303 = vmatprep.subr.mxu0 0.0
        %304 = vmatpush2.msra.mxu0 0.0
        %305 = vmatprep.subr.mxu0 0.0
        %306 = vmatpush2.msra.mxu0 0.0
        %307 = vmatprep.subr.mxu0 0.0
        %308 = vmatpush2.msra.mxu0 0.0
        %309 = vmatprep.subr.mxu0 0.0
        %310 = vmatpush2.msra.mxu0 0.0
        %311 = vmatprep.subr.mxu0 0.0
        %312 = vmatpush2.msra.mxu0 0.0
        %313 = vmatprep.subr.mxu0 0.0
        %314 = vmatpush2.msra.mxu0 0.0
        %315 = vmatprep.subr.mxu0 0.0
        %316 = vmatpush2.msra.mxu0 0.0
        %317 = vmatprep.subr.mxu0 0.0
        %318 = vmatpush2.msra.mxu0 0.0
        %319 = vmatprep.subr.mxu0 0.0
        %320 = vmatpush2.msra.mxu0 0.0
        %321 = vmatprep.mubr.f32.mxu0 0.0
        %322 = vmatmul.mubr.f32.gmra.mxu0 %v252
        %v323 = vpop.f32.mrf.mxu0
        %v324 = vadd.f32 0.0, %v323
        %v325 = vpop.f32.mrf.mxu0
        %326 = vmatprep.mubr.f32.mxu0 0.0
        %327 = vmatmul.mubr.f32.gmra.mxu0 %v255
        %v328 = vpop.f32.mrf.mxu0
        %v329 = vadd.f32 0.0, %v328
        %v330 = vpop.f32.mrf.mxu0
        %331 = vdwg.mxu0
        %v332 = vld [vmem:[%s3] sm:$0xff]
        %v333 = vld [vmem:[%s3 + $0x8] sm:$0x1f]
        %v334 = vld [vmem:[%s239] sm:$0x3f]
        %v335 = vlaneseq
        %v336 = vshrl.u32 %v335, 7
        %v337 = vsub.s32 4, %v336
        %v338 = vrot.slane %v333, %v337
        %vm339 = vcmask 97280
        %v341 = vsel %vm339, %v334, 0
        %vm343 = vcmask 1043456
        %v345 = vsel %vm343, %v333, 0
        %347 = vmatprep.subr.mxu0 0.0
        %348 = vmatpush1.msra.mxu0 0.0
        %349 = vmatprep.subr.mxu0 0.0
        %350 = vmatpush1.msra.mxu0 0.0
        %351 = vmatprep.subr.mxu0 0.0
        %352 = vmatpush1.msra.mxu0 0.0
        %353 = vmatprep.subr.mxu0 0.0
        %354 = vmatpush1.msra.mxu0 0.0
        %355 = vmatprep.subr.mxu0 0.0
        %356 = vmatpush1.msra.mxu0 0.0
        %357 = vmatprep.subr.mxu0 0.0
        %358 = vmatpush1.msra.mxu0 0.0
        %359 = vmatprep.subr.mxu0 0.0
        %360 = vmatpush1.msra.mxu0 0.0
        %361 = vmatprep.subr.mxu0 0.0
        %362 = vmatpush1.msra.mxu0 0.0
        %363 = vmatprep.subr.mxu0 0.0
        %364 = vmatpush1.msra.mxu0 0.0
        %365 = vmatprep.subr.mxu0 0.0
        %366 = vmatpush1.msra.mxu0 0.0
        %367 = vmatprep.subr.mxu0 0.0
        %368 = vmatpush1.msra.mxu0 0.0
        %369 = vmatprep.subr.mxu0 0.0
        %370 = vmatpush1.msra.mxu0 0.0
        %371 = vmatprep.subr.mxu0 0.0
        %372 = vmatpush1.msra.mxu0 0.0
        %373 = vmatprep.subr.mxu0 0.0
        %374 = vmatpush1.msra.mxu0 0.0
        %375 = vmatprep.subr.mxu0 0.0
        %376 = vmatpush1.msra.mxu0 %v345
        %377 = vmatprep.subr.mxu0 0.0
        %378 = vmatpush1.msra.mxu0 %v332
        %379 = vmatprep.subr.mxu0 0.0
        %380 = vmatpush2.msra.mxu0 0.0
        %381 = vmatprep.subr.mxu0 0.0
        %382 = vmatpush2.msra.mxu0 0.0
        %383 = vmatprep.subr.mxu0 0.0
        %384 = vmatpush2.msra.mxu0 0.0
        %385 = vmatprep.subr.mxu0 0.0
        %386 = vmatpush2.msra.mxu0 0.0
        %387 = vmatprep.subr.mxu0 0.0
        %388 = vmatpush2.msra.mxu0 0.0
        %389 = vmatprep.subr.mxu0 0.0
        %390 = vmatpush2.msra.mxu0 0.0
        %391 = vmatprep.subr.mxu0 0.0
        %392 = vmatpush2.msra.mxu0 0.0
        %393 = vmatprep.subr.mxu0 0.0
        %394 = vmatpush2.msra.mxu0 0.0
        %395 = vmatprep.subr.mxu0 0.0
        %396 = vmatpush2.msra.mxu0 0.0
        %397 = vmatprep.subr.mxu0 0.0
        %398 = vmatpush2.msra.mxu0 0.0
        %399 = vmatprep.subr.mxu0 0.0
        %400 = vmatpush2.msra.mxu0 0.0
        %401 = vmatprep.subr.mxu0 0.0
        %402 = vmatpush2.msra.mxu0 0.0
        %403 = vmatprep.subr.mxu0 0.0
        %404 = vmatpush2.msra.mxu0 0.0
        %405 = vmatprep.subr.mxu0 0.0
        %406 = vmatpush2.msra.mxu0 0.0
        %407 = vmatprep.subr.mxu0 0.0
        %408 = vmatpush2.msra.mxu0 0.0
        %409 = vmatprep.subr.mxu0 0.0
        %410 = vmatpush2.msra.mxu0 0.0
        %411 = vmatprep.mubr.f32.mxu0 0.0
        %412 = vmatmul.mubr.f32.gmra.mxu0 %v341
        %v413 = vpop.f32.mrf.mxu0
        %v414 = vadd.f32 %v338, %v413
        %v415 = vpop.f32.mrf.mxu0
        %416 = vdwg.mxu0
        %v417 = vld [vmem:[%s4] sm:$0xff]
        %v418 = vld [vmem:[%s4 + $0x8] sm:$0xff]
        %v419 = vld [vmem:[%s4 + $0x10] sm:$0xff]
        %v420 = vld [vmem:[%s4 + $0x18] sm:$0xff]
        %v421 = vld [vmem:[%s4 + $0x20] sm:$0xff]
        %v422 = vld [vmem:[%s4 + $0x28] sm:$0xff]
        %424 = vset.pattern.permute.xlu0 16
        %425 = vperm.xlu0 %424, %v417
        %v426 = vpop.permute.xlu0 %425
        %429 = vset.pattern.permute.xlu0 16
        %430 = vperm.xlu0 %429, %v418
        %v431 = vpop.permute.xlu0 %430
        %vm433 = vcmask 130048
        %v434 = vsel %vm433, %v417, 0
        %v436 = vsel %vm433, %v418, 0
        %438 = vmatprep.subr.mxu0 0.0
        %439 = vmatpush1.msra.mxu0 0.0
        %440 = vmatprep.subr.mxu0 0.0
        %441 = vmatpush1.msra.mxu0 0.0
        %442 = vmatprep.subr.mxu0 0.0
        %443 = vmatpush1.msra.mxu0 0.0
        %444 = vmatprep.subr.mxu0 0.0
        %445 = vmatpush1.msra.mxu0 0.0
        %446 = vmatprep.subr.mxu0 0.0
        %447 = vmatpush1.msra.mxu0 0.0
        %448 = vmatprep.subr.mxu0 0.0
        %449 = vmatpush1.msra.mxu0 0.0
        %450 = vmatprep.subr.mxu0 0.0
        %451 = vmatpush1.msra.mxu0 0.0
        %452 = vmatprep.subr.mxu0 0.0
        %453 = vmatpush1.msra.mxu0 0.0
        %454 = vmatprep.subr.mxu0 0.0
        %455 = vmatpush1.msra.mxu0 0.0
        %456 = vmatprep.subr.mxu0 0.0
        %457 = vmatpush1.msra.mxu0 0.0
        %458 = vmatprep.subr.mxu0 0.0
        %459 = vmatpush1.msra.mxu0 0.0
        %460 = vmatprep.subr.mxu0 0.0
        %461 = vmatpush1.msra.mxu0 0.0
        %462 = vmatprep.subr.mxu0 0.0
        %463 = vmatpush1.msra.mxu0 0.0
        %464 = vmatprep.subr.mxu0 0.0
        %465 = vmatpush1.msra.mxu0 0.0
        %466 = vmatprep.subr.mxu0 0.0
        %467 = vmatpush1.msra.mxu0 %v329
        %468 = vmatprep.subr.mxu0 0.0
        %469 = vmatpush1.msra.mxu0 %v324
        %470 = vmatprep.subr.mxu0 0.0
        %471 = vmatpush2.msra.mxu0 0.0
        %472 = vmatprep.subr.mxu0 0.0
        %473 = vmatpush2.msra.mxu0 0.0
        %474 = vmatprep.subr.mxu0 0.0
        %475 = vmatpush2.msra.mxu0 0.0
        %476 = vmatprep.subr.mxu0 0.0
        %477 = vmatpush2.msra.mxu0 0.0
        %478 = vmatprep.subr.mxu0 0.0
        %479 = vmatpush2.msra.mxu0 0.0
        %480 = vmatprep.subr.mxu0 0.0
        %481 = vmatpush2.msra.mxu0 0.0
        %482 = vmatprep.subr.mxu0 0.0
        %483 = vmatpush2.msra.mxu0 0.0
        %484 = vmatprep.subr.mxu0 0.0
        %485 = vmatpush2.msra.mxu0 0.0
        %486 = vmatprep.subr.mxu0 0.0
        %487 = vmatpush2.msra.mxu0 0.0
        %488 = vmatprep.subr.mxu0 0.0
        %489 = vmatpush2.msra.mxu0 0.0
        %490 = vmatprep.subr.mxu0 0.0
        %491 = vmatpush2.msra.mxu0 0.0
        %492 = vmatprep.subr.mxu0 0.0
        %493 = vmatpush2.msra.mxu0 0.0
        %494 = vmatprep.subr.mxu0 0.0
        %495 = vmatpush2.msra.mxu0 0.0
        %496 = vmatprep.subr.mxu0 0.0
        %497 = vmatpush2.msra.mxu0 0.0
        %498 = vmatprep.subr.mxu0 0.0
        %499 = vmatpush2.msra.mxu0 0.0
        %500 = vmatprep.subr.mxu0 0.0
        %501 = vmatpush2.msra.mxu0 0.0
        %502 = vmatprep.mubr.f32.mxu0 0.0
        %503 = vmatmul.mubr.f32.gmra.mxu0 %v434
        %v504 = vpop.f32.mrf.mxu0
        %v505 = vadd.f32 %v426, %v504
        %v506 = vpop.f32.mrf.mxu0
        %507 = vmatprep.mubr.f32.mxu0 0.0
        %508 = vmatmul.mubr.f32.gmra.mxu0 %v436
        %v509 = vpop.f32.mrf.mxu0
        %v510 = vadd.f32 %v431, %v509
        %v511 = vpop.f32.mrf.mxu0
        %512 = vdwg.mxu0
        %v514 = vsel %vm433, %v414, 0
        %516 = vmatprep.subr.mxu0 0.0
        %517 = vmatpush1.msra.mxu0 0.0
        %518 = vmatprep.subr.mxu0 0.0
        %519 = vmatpush1.msra.mxu0 0.0
        %520 = vmatprep.subr.mxu0 0.0
        %521 = vmatpush1.msra.mxu0 0.0
        %522 = vmatprep.subr.mxu0 0.0
        %523 = vmatpush1.msra.mxu0 0.0
        %524 = vmatprep.subr.mxu0 0.0
        %525 = vmatpush1.msra.mxu0 0.0
        %526 = vmatprep.subr.mxu0 0.0
        %527 = vmatpush1.msra.mxu0 0.0
        %528 = vmatprep.subr.mxu0 0.0
        %529 = vmatpush1.msra.mxu0 0.0
        %530 = vmatprep.subr.mxu0 0.0
        %531 = vmatpush1.msra.mxu0 0.0
        %532 = vmatprep.subr.mxu0 0.0
        %533 = vmatpush1.msra.mxu0 0.0
        %534 = vmatprep.subr.mxu0 0.0
        %535 = vmatpush1.msra.mxu0 0.0
        %536 = vmatprep.subr.mxu0 0.0
        %537 = vmatpush1.msra.mxu0 0.0
        %538 = vmatprep.subr.mxu0 0.0
        %539 = vmatpush1.msra.mxu0 0.0
        %540 = vmatprep.subr.mxu0 0.0
        %541 = vmatpush1.msra.mxu0 0.0
        %542 = vmatprep.subr.mxu0 0.0
        %543 = vmatpush1.msra.mxu0 0.0
        %544 = vmatprep.subr.mxu0 0.0
        %545 = vmatpush1.msra.mxu0 %v510
        %546 = vmatprep.subr.mxu0 0.0
        %547 = vmatpush1.msra.mxu0 %v505
        %548 = vmatprep.subr.mxu0 0.0
        %549 = vmatpush2.msra.mxu0 0.0
        %550 = vmatprep.subr.mxu0 0.0
        %551 = vmatpush2.msra.mxu0 0.0
        %552 = vmatprep.subr.mxu0 0.0
        %553 = vmatpush2.msra.mxu0 0.0
        %554 = vmatprep.subr.mxu0 0.0
        %555 = vmatpush2.msra.mxu0 0.0
        %556 = vmatprep.subr.mxu0 0.0
        %557 = vmatpush2.msra.mxu0 0.0
        %558 = vmatprep.subr.mxu0 0.0
        %559 = vmatpush2.msra.mxu0 0.0
        %560 = vmatprep.subr.mxu0 0.0
        %561 = vmatpush2.msra.mxu0 0.0
        %562 = vmatprep.subr.mxu0 0.0
        %563 = vmatpush2.msra.mxu0 0.0
        %564 = vmatprep.subr.mxu0 0.0
        %565 = vmatpush2.msra.mxu0 0.0
        %566 = vmatprep.subr.mxu0 0.0
        %567 = vmatpush2.msra.mxu0 0.0
        %568 = vmatprep.subr.mxu0 0.0
        %569 = vmatpush2.msra.mxu0 0.0
        %570 = vmatprep.subr.mxu0 0.0
        %571 = vmatpush2.msra.mxu0 0.0
        %572 = vmatprep.subr.mxu0 0.0
        %573 = vmatpush2.msra.mxu0 0.0
        %574 = vmatprep.subr.mxu0 0.0
        %575 = vmatpush2.msra.mxu0 0.0
        %576 = vmatprep.subr.mxu0 0.0
        %577 = vmatpush2.msra.mxu0 0.0
        %578 = vmatprep.subr.mxu0 0.0
        %579 = vmatpush2.msra.mxu0 0.0
        %580 = vmatprep.mubr.f32.mxu0 0.0
        %581 = vmatmul.mubr.f32.gmra.mxu0 %v514
        %v582 = vpop.f32.mrf.mxu0
        %v583 = vadd.f32 0.0, %v582
        %v584 = vpop.f32.mrf.mxu0
        %585 = vdwg.mxu0
        %vm586 = vcmask 62464
        %v587 = vsel %vm586, %v583, -inf
        %v588 = vrot.slane %v587, 4
        %v589 = vmax.f32 %v587, %v588
        %v590 = vrot.slane %v589, 2
        %v591 = vmax.f32 %v589, %v590
        %v592 = vrot.slane %v591, 1
        %v593 = vmax.f32 %v591, %v592
        %v594 = vsub.f32 %v583, %v593
        %v595 = vmul.f32 %v594, 1.442695
        %v596 = vpow.pop %v595
        %v597 = vsel %vm586, %v596, 0.0
        %v598 = vrot.slane %v597, 4
        %v599 = vadd.f32 %v597, %v598
        %v600 = vrot.slane %v599, 2
        %v601 = vadd.f32 %v599, %v600
        %v602 = vrot.slane %v601, 1
        %v603 = vadd.f32 %v601, %v602
        %v604 = vrcp.pop %v603
        %v605 = vmul.f32 %v596, %v604
        %606 = vrot.lane.b32.xlu0 %v414, 112
        %v607 = vpop.permute.xlu0 %606
        %609 = vxpose.xlu0.b32.start [1/16] %v607, 128
        %610 = vxpose.xlu0.b32.cont [2/16] 0.0, 128
        %611 = vxpose.xlu0.b32.cont [3/16] 0.0, 128
        %612 = vxpose.xlu0.b32.cont [4/16] 0.0, 128
        %613 = vxpose.xlu0.b32.cont [5/16] 0.0, 128
        %614 = vxpose.xlu0.b32.cont [6/16] 0.0, 128
        %615 = vxpose.xlu0.b32.cont [7/16] 0.0, 128
        %616 = vxpose.xlu0.b32.cont [8/16] 0.0, 128
        %617 = vxpose.xlu0.b32.cont [9/16] 0.0, 128
        %618 = vxpose.xlu0.b32.cont [10/16] 0.0, 128
        %619 = vxpose.xlu0.b32.cont [11/16] 0.0, 128
        %620 = vxpose.xlu0.b32.cont [12/16] 0.0, 128
        %621 = vxpose.xlu0.b32.cont [13/16] 0.0, 128
        %622 = vxpose.xlu0.b32.cont [14/16] 0.0, 128
        %623 = vxpose.xlu0.b32.cont [15/16] 0.0, 128
        %624 = vxpose.xlu0.b32.end [16/16] 0.0, 128
        %v625 = vpop.trf.xlu0
        %v626 = vpop.trf.xlu0
        %v627 = vpop.trf.xlu0
        %v628 = vpop.trf.xlu0
        %v629 = vpop.trf.xlu0
        %v630 = vpop.trf.xlu0
        %v631 = vpop.trf.xlu0
        %v632 = vpop.trf.xlu0
        %v633 = vpop.trf.xlu0
        %v634 = vpop.trf.xlu0
        %v635 = vpop.trf.xlu0
        %v636 = vpop.trf.xlu0
        %v637 = vpop.trf.xlu0
        %v638 = vpop.trf.xlu0
        %v639 = vpop.trf.xlu0
        %v640 = vpop.trf.xlu0
        %vm641 = vcmask 48128
        %v643 = vsel %vm641, %v625, 0
        %v646 = vsel %vm641, %v626, 0
        %vm648 = vcmask 1045504
        %v650 = vsel %vm648, %v605, 0
        %652 = vmatprep.subr.mxu0 0.0
        %653 = vmatpush1.msra.mxu0 0.0
        %654 = vmatprep.subr.mxu0 0.0
        %655 = vmatpush1.msra.mxu0 0.0
        %656 = vmatprep.subr.mxu0 0.0
        %657 = vmatpush1.msra.mxu0 0.0
        %658 = vmatprep.subr.mxu0 0.0
        %659 = vmatpush1.msra.mxu0 0.0
        %660 = vmatprep.subr.mxu0 0.0
        %661 = vmatpush1.msra.mxu0 0.0
        %662 = vmatprep.subr.mxu0 0.0
        %663 = vmatpush1.msra.mxu0 0.0
        %664 = vmatprep.subr.mxu0 0.0
        %665 = vmatpush1.msra.mxu0 0.0
        %666 = vmatprep.subr.mxu0 0.0
        %667 = vmatpush1.msra.mxu0 0.0
        %668 = vmatprep.subr.mxu0 0.0
        %669 = vmatpush1.msra.mxu0 0.0
        %670 = vmatprep.subr.mxu0 0.0
        %671 = vmatpush1.msra.mxu0 0.0
        %672 = vmatprep.subr.mxu0 0.0
        %673 = vmatpush1.msra.mxu0 0.0
        %674 = vmatprep.subr.mxu0 0.0
        %675 = vmatpush1.msra.mxu0 0.0
        %676 = vmatprep.subr.mxu0 0.0
        %677 = vmatpush1.msra.mxu0 0.0
        %678 = vmatprep.subr.mxu0 0.0
        %679 = vmatpush1.msra.mxu0 0.0
        %680 = vmatprep.subr.mxu0 0.0
        %681 = vmatpush1.msra.mxu0 0.0
        %682 = vmatprep.subr.mxu0 0.0
        %683 = vmatpush1.msra.mxu0 %v650
        %684 = vmatprep.subr.mxu0 0.0
        %685 = vmatpush2.msra.mxu0 0.0
        %686 = vmatprep.subr.mxu0 0.0
        %687 = vmatpush2.msra.mxu0 0.0
        %688 = vmatprep.subr.mxu0 0.0
        %689 = vmatpush2.msra.mxu0 0.0
        %690 = vmatprep.subr.mxu0 0.0
        %691 = vmatpush2.msra.mxu0 0.0
        %692 = vmatprep.subr.mxu0 0.0
        %693 = vmatpush2.msra.mxu0 0.0
        %694 = vmatprep.subr.mxu0 0.0
        %695 = vmatpush2.msra.mxu0 0.0
        %696 = vmatprep.subr.mxu0 0.0
        %697 = vmatpush2.msra.mxu0 0.0
        %698 = vmatprep.subr.mxu0 0.0
        %699 = vmatpush2.msra.mxu0 0.0
        %700 = vmatprep.subr.mxu0 0.0
        %701 = vmatpush2.msra.mxu0 0.0
        %702 = vmatprep.subr.mxu0 0.0
        %703 = vmatpush2.msra.mxu0 0.0
        %704 = vmatprep.subr.mxu0 0.0
        %705 = vmatpush2.msra.mxu0 0.0
        %706 = vmatprep.subr.mxu0 0.0
        %707 = vmatpush2.msra.mxu0 0.0
        %708 = vmatprep.subr.mxu0 0.0
        %709 = vmatpush2.msra.mxu0 0.0
        %710 = vmatprep.subr.mxu0 0.0
        %711 = vmatpush2.msra.mxu0 0.0
        %712 = vmatprep.subr.mxu0 0.0
        %713 = vmatpush2.msra.mxu0 0.0
        %714 = vmatprep.subr.mxu0 0.0
        %715 = vmatpush2.msra.mxu0 0.0
        %716 = vmatprep.mubr.f32.mxu0 0.0
        %717 = vmatmul.mubr.f32.gmra.mxu0 %v643
        %v718 = vpop.f32.mrf.mxu0
        %v719 = vadd.f32 0.0, %v718
        %v720 = vpop.f32.mrf.mxu0
        %721 = vmatprep.mubr.f32.mxu0 0.0
        %722 = vmatmul.mubr.f32.gmra.mxu0 %v646
        %v723 = vpop.f32.mrf.mxu0
        %v724 = vadd.f32 0.0, %v723
        %v725 = vpop.f32.mrf.mxu0
        %726 = vdwg.mxu0
        %vm727 = vcmask 64512
        %v728 = vsel %vm727, %v719, 0.0
        %729 = vadd.xlane.f32.xlu0 %v728
        %v730 = vpop.xlane.xlu0 %729
        %v731 = vsel %vm727, %v724, 0.0
        %732 = vadd.xlane.f32.xlu0 %v731
        %v733 = vpop.xlane.xlu0 %732
        %v734 = vrcp.pop 8.0
        %v735 = vmul.f32 %v730, %v734
        %v736 = vmul.f32 %v733, %v734
        %v737 = vadd.f32 %v324, %v735
        %v738 = vadd.f32 %v329, %v736
        %740 = vset.pattern.permute.xlu0 16
        %741 = vperm.xlu0 %740, %v419
        %v742 = vpop.permute.xlu0 %741
        %745 = vset.pattern.permute.xlu0 16
        %746 = vperm.xlu0 %745, %v420
        %v747 = vpop.permute.xlu0 %746
        %751 = vrot.lane.b32.xlu0 %v737, 120
        %v752 = vpop.permute.xlu0 %751
        %753 = vrot.lane.b32.xlu0 %v738, 120
        %v754 = vpop.permute.xlu0 %753
        %v757 = vsel %vm433, %v419, 0
        %v759 = vsel %vm433, %v420, 0
        %761 = vmatprep.subr.mxu0 0.0
        %762 = vmatpush1.msra.mxu0 0.0
        %763 = vmatprep.subr.mxu0 0.0
        %764 = vmatpush1.msra.mxu0 0.0
        %765 = vmatprep.subr.mxu0 0.0
        %766 = vmatpush1.msra.mxu0 0.0
        %767 = vmatprep.subr.mxu0 0.0
        %768 = vmatpush1.msra.mxu0 0.0
        %769 = vmatprep.subr.mxu0 0.0
        %770 = vmatpush1.msra.mxu0 0.0
        %771 = vmatprep.subr.mxu0 0.0
        %772 = vmatpush1.msra.mxu0 0.0
        %773 = vmatprep.subr.mxu0 0.0
        %774 = vmatpush1.msra.mxu0 0.0
        %775 = vmatprep.subr.mxu0 0.0
        %776 = vmatpush1.msra.mxu0 0.0
        %777 = vmatprep.subr.mxu0 0.0
        %778 = vmatpush1.msra.mxu0 0.0
        %779 = vmatprep.subr.mxu0 0.0
        %780 = vmatpush1.msra.mxu0 0.0
        %781 = vmatprep.subr.mxu0 0.0
        %782 = vmatpush1.msra.mxu0 0.0
        %783 = vmatprep.subr.mxu0 0.0
        %784 = vmatpush1.msra.mxu0 0.0
        %785 = vmatprep.subr.mxu0 0.0
        %786 = vmatpush1.msra.mxu0 0.0
        %787 = vmatprep.subr.mxu0 0.0
        %788 = vmatpush1.msra.mxu0 0.0
        %789 = vmatprep.subr.mxu0 0.0
        %790 = vmatpush1.msra.mxu0 %v754
        %791 = vmatprep.subr.mxu0 0.0
        %792 = vmatpush1.msra.mxu0 %v752
        %793 = vmatprep.subr.mxu0 0.0
        %794 = vmatpush2.msra.mxu0 0.0
        %795 = vmatprep.subr.mxu0 0.0
        %796 = vmatpush2.msra.mxu0 0.0
        %797 = vmatprep.subr.mxu0 0.0
        %798 = vmatpush2.msra.mxu0 0.0
        %799 = vmatprep.subr.mxu0 0.0
        %800 = vmatpush2.msra.mxu0 0.0
        %801 = vmatprep.subr.mxu0 0.0
        %802 = vmatpush2.msra.mxu0 0.0
        %803 = vmatprep.subr.mxu0 0.0
        %804 = vmatpush2.msra.mxu0 0.0
        %805 = vmatprep.subr.mxu0 0.0
        %806 = vmatpush2.msra.mxu0 0.0
        %807 = vmatprep.subr.mxu0 0.0
        %808 = vmatpush2.msra.mxu0 0.0
        %809 = vmatprep.subr.mxu0 0.0
        %810 = vmatpush2.msra.mxu0 0.0
        %811 = vmatprep.subr.mxu0 0.0
        %812 = vmatpush2.msra.mxu0 0.0
        %813 = vmatprep.subr.mxu0 0.0
        %814 = vmatpush2.msra.mxu0 0.0
        %815 = vmatprep.subr.mxu0 0.0
        %816 = vmatpush2.msra.mxu0 0.0
        %817 = vmatprep.subr.mxu0 0.0
        %818 = vmatpush2.msra.mxu0 0.0
        %819 = vmatprep.subr.mxu0 0.0
        %820 = vmatpush2.msra.mxu0 0.0
        %821 = vmatprep.subr.mxu0 0.0
        %822 = vmatpush2.msra.mxu0 0.0
        %823 = vmatprep.subr.mxu0 0.0
        %824 = vmatpush2.msra.mxu0 0.0
        %825 = vmatprep.mubr.f32.mxu0 0.0
        %826 = vmatmul.mubr.f32.gmra.mxu0 %v757
        %v827 = vpop.f32.mrf.mxu0
        %v828 = vadd.f32 %v742, %v827
        %v829 = vpop.f32.mrf.mxu0
        %830 = vmatprep.mubr.f32.mxu0 0.0
        %831 = vmatmul.mubr.f32.gmra.mxu0 %v759
        %v832 = vpop.f32.mrf.mxu0
        %v833 = vadd.f32 %v747, %v832
        %v834 = vpop.f32.mrf.mxu0
        %835 = vdwg.mxu0
        %836 = vrot.lane.b32.xlu0 %v414, 96
        %v837 = vpop.permute.xlu0 %836
        %v838 = vsel %vm433, %v837, 0
        %840 = vmatprep.subr.mxu0 0.0
        %841 = vmatpush1.msra.mxu0 0.0
        %842 = vmatprep.subr.mxu0 0.0
        %843 = vmatpush1.msra.mxu0 0.0
        %844 = vmatprep.subr.mxu0 0.0
        %845 = vmatpush1.msra.mxu0 0.0
        %846 = vmatprep.subr.mxu0 0.0
        %847 = vmatpush1.msra.mxu0 0.0
        %848 = vmatprep.subr.mxu0 0.0
        %849 = vmatpush1.msra.mxu0 0.0
        %850 = vmatprep.subr.mxu0 0.0
        %851 = vmatpush1.msra.mxu0 0.0
        %852 = vmatprep.subr.mxu0 0.0
        %853 = vmatpush1.msra.mxu0 0.0
        %854 = vmatprep.subr.mxu0 0.0
        %855 = vmatpush1.msra.mxu0 0.0
        %856 = vmatprep.subr.mxu0 0.0
        %857 = vmatpush1.msra.mxu0 0.0
        %858 = vmatprep.subr.mxu0 0.0
        %859 = vmatpush1.msra.mxu0 0.0
        %860 = vmatprep.subr.mxu0 0.0
        %861 = vmatpush1.msra.mxu0 0.0
        %862 = vmatprep.subr.mxu0 0.0
        %863 = vmatpush1.msra.mxu0 0.0
        %864 = vmatprep.subr.mxu0 0.0
        %865 = vmatpush1.msra.mxu0 0.0
        %866 = vmatprep.subr.mxu0 0.0
        %867 = vmatpush1.msra.mxu0 0.0
        %868 = vmatprep.subr.mxu0 0.0
        %869 = vmatpush1.msra.mxu0 %v833
        %870 = vmatprep.subr.mxu0 0.0
        %871 = vmatpush1.msra.mxu0 %v828
        %872 = vmatprep.subr.mxu0 0.0
        %873 = vmatpush2.msra.mxu0 0.0
        %874 = vmatprep.subr.mxu0 0.0
        %875 = vmatpush2.msra.mxu0 0.0
        %876 = vmatprep.subr.mxu0 0.0
        %877 = vmatpush2.msra.mxu0 0.0
        %878 = vmatprep.subr.mxu0 0.0
        %879 = vmatpush2.msra.mxu0 0.0
        %880 = vmatprep.subr.mxu0 0.0
        %881 = vmatpush2.msra.mxu0 0.0
        %882 = vmatprep.subr.mxu0 0.0
        %883 = vmatpush2.msra.mxu0 0.0
        %884 = vmatprep.subr.mxu0 0.0
        %885 = vmatpush2.msra.mxu0 0.0
        %886 = vmatprep.subr.mxu0 0.0
        %887 = vmatpush2.msra.mxu0 0.0
        %888 = vmatprep.subr.mxu0 0.0
        %889 = vmatpush2.msra.mxu0 0.0
        %890 = vmatprep.subr.mxu0 0.0
        %891 = vmatpush2.msra.mxu0 0.0
        %892 = vmatprep.subr.mxu0 0.0
        %893 = vmatpush2.msra.mxu0 0.0
        %894 = vmatprep.subr.mxu0 0.0
        %895 = vmatpush2.msra.mxu0 0.0
        %896 = vmatprep.subr.mxu0 0.0
        %897 = vmatpush2.msra.mxu0 0.0
        %898 = vmatprep.subr.mxu0 0.0
        %899 = vmatpush2.msra.mxu0 0.0
        %900 = vmatprep.subr.mxu0 0.0
        %901 = vmatpush2.msra.mxu0 0.0
        %902 = vmatprep.subr.mxu0 0.0
        %903 = vmatpush2.msra.mxu0 0.0
        %904 = vmatprep.mubr.f32.mxu0 0.0
        %905 = vmatmul.mubr.f32.gmra.mxu0 %v838
        %v906 = vpop.f32.mrf.mxu0
        %v907 = vadd.f32 0.0, %v906
        %v908 = vpop.f32.mrf.mxu0
        %909 = vdwg.mxu0
        %v910 = vsel %vm586, %v907, -inf
        %v911 = vrot.slane %v910, 4
        %v912 = vmax.f32 %v910, %v911
        %v913 = vrot.slane %v912, 2
        %v914 = vmax.f32 %v912, %v913
        %v915 = vrot.slane %v914, 1
        %v916 = vmax.f32 %v914, %v915
        %v917 = vsub.f32 %v907, %v916
        %v918 = vmul.f32 %v917, 1.442695
        %v919 = vpow.pop %v918
        %v920 = vsel %vm586, %v919, 0.0
        %v921 = vrot.slane %v920, 4
        %v922 = vadd.f32 %v920, %v921
        %v923 = vrot.slane %v922, 2
        %v924 = vadd.f32 %v922, %v923
        %v925 = vrot.slane %v924, 1
        %v926 = vadd.f32 %v924, %v925
        %v927 = vrcp.pop %v926
        %v928 = vmul.f32 %v919, %v927
        %929 = vrot.lane.b32.xlu0 %v414, 80
        %v930 = vpop.permute.xlu0 %929
        %932 = vxpose.xlu0.b32.start [1/16] %v930, 128
        %933 = vxpose.xlu0.b32.cont [2/16] 0.0, 128
        %934 = vxpose.xlu0.b32.cont [3/16] 0.0, 128
        %935 = vxpose.xlu0.b32.cont [4/16] 0.0, 128
        %936 = vxpose.xlu0.b32.cont [5/16] 0.0, 128
        %937 = vxpose.xlu0.b32.cont [6/16] 0.0, 128
        %938 = vxpose.xlu0.b32.cont [7/16] 0.0, 128
        %939 = vxpose.xlu0.b32.cont [8/16] 0.0, 128
        %940 = vxpose.xlu0.b32.cont [9/16] 0.0, 128
        %941 = vxpose.xlu0.b32.cont [10/16] 0.0, 128
        %942 = vxpose.xlu0.b32.cont [11/16] 0.0, 128
        %943 = vxpose.xlu0.b32.cont [12/16] 0.0, 128
        %944 = vxpose.xlu0.b32.cont [13/16] 0.0, 128
        %945 = vxpose.xlu0.b32.cont [14/16] 0.0, 128
        %946 = vxpose.xlu0.b32.cont [15/16] 0.0, 128
        %947 = vxpose.xlu0.b32.end [16/16] 0.0, 128
        %v948 = vpop.trf.xlu0
        %v949 = vpop.trf.xlu0
        %v950 = vpop.trf.xlu0
        %v951 = vpop.trf.xlu0
        %v952 = vpop.trf.xlu0
        %v953 = vpop.trf.xlu0
        %v954 = vpop.trf.xlu0
        %v955 = vpop.trf.xlu0
        %v956 = vpop.trf.xlu0
        %v957 = vpop.trf.xlu0
        %v958 = vpop.trf.xlu0
        %v959 = vpop.trf.xlu0
        %v960 = vpop.trf.xlu0
        %v961 = vpop.trf.xlu0
        %v962 = vpop.trf.xlu0
        %v963 = vpop.trf.xlu0
        %v965 = vsel %vm641, %v948, 0
        %v968 = vsel %vm641, %v949, 0
        %v971 = vsel %vm648, %v928, 0
        %973 = vmatprep.subr.mxu0 0.0
        %974 = vmatpush1.msra.mxu0 0.0
        %975 = vmatprep.subr.mxu0 0.0
        %976 = vmatpush1.msra.mxu0 0.0
        %977 = vmatprep.subr.mxu0 0.0
        %978 = vmatpush1.msra.mxu0 0.0
        %979 = vmatprep.subr.mxu0 0.0
        %980 = vmatpush1.msra.mxu0 0.0
        %981 = vmatprep.subr.mxu0 0.0
        %982 = vmatpush1.msra.mxu0 0.0
        %983 = vmatprep.subr.mxu0 0.0
        %984 = vmatpush1.msra.mxu0 0.0
        %985 = vmatprep.subr.mxu0 0.0
        %986 = vmatpush1.msra.mxu0 0.0
        %987 = vmatprep.subr.mxu0 0.0
        %988 = vmatpush1.msra.mxu0 0.0
        %989 = vmatprep.subr.mxu0 0.0
        %990 = vmatpush1.msra.mxu0 0.0
        %991 = vmatprep.subr.mxu0 0.0
        %992 = vmatpush1.msra.mxu0 0.0
        %993 = vmatprep.subr.mxu0 0.0
        %994 = vmatpush1.msra.mxu0 0.0
        %995 = vmatprep.subr.mxu0 0.0
        %996 = vmatpush1.msra.mxu0 0.0
        %997 = vmatprep.subr.mxu0 0.0
        %998 = vmatpush1.msra.mxu0 0.0
        %999 = vmatprep.subr.mxu0 0.0
        %1000 = vmatpush1.msra.mxu0 0.0
        %1001 = vmatprep.subr.mxu0 0.0
        %1002 = vmatpush1.msra.mxu0 0.0
        %1003 = vmatprep.subr.mxu0 0.0
        %1004 = vmatpush1.msra.mxu0 %v971
        %1005 = vmatprep.subr.mxu0 0.0
        %1006 = vmatpush2.msra.mxu0 0.0
        %1007 = vmatprep.subr.mxu0 0.0
        %1008 = vmatpush2.msra.mxu0 0.0
        %1009 = vmatprep.subr.mxu0 0.0
        %1010 = vmatpush2.msra.mxu0 0.0
        %1011 = vmatprep.subr.mxu0 0.0
        %1012 = vmatpush2.msra.mxu0 0.0
        %1013 = vmatprep.subr.mxu0 0.0
        %1014 = vmatpush2.msra.mxu0 0.0
        %1015 = vmatprep.subr.mxu0 0.0
        %1016 = vmatpush2.msra.mxu0 0.0
        %1017 = vmatprep.subr.mxu0 0.0
        %1018 = vmatpush2.msra.mxu0 0.0
        %1019 = vmatprep.subr.mxu0 0.0
        %1020 = vmatpush2.msra.mxu0 0.0
        %1021 = vmatprep.subr.mxu0 0.0
        %1022 = vmatpush2.msra.mxu0 0.0
        %1023 = vmatprep.subr.mxu0 0.0
        %1024 = vmatpush2.msra.mxu0 0.0
        %1025 = vmatprep.subr.mxu0 0.0
        %1026 = vmatpush2.msra.mxu0 0.0
        %1027 = vmatprep.subr.mxu0 0.0
        %1028 = vmatpush2.msra.mxu0 0.0
        %1029 = vmatprep.subr.mxu0 0.0
        %1030 = vmatpush2.msra.mxu0 0.0
        %1031 = vmatprep.subr.mxu0 0.0
        %1032 = vmatpush2.msra.mxu0 0.0
        %1033 = vmatprep.subr.mxu0 0.0
        %1034 = vmatpush2.msra.mxu0 0.0
        %1035 = vmatprep.subr.mxu0 0.0
        %1036 = vmatpush2.msra.mxu0 0.0
        %1037 = vmatprep.mubr.f32.mxu0 0.0
        %1038 = vmatmul.mubr.f32.gmra.mxu0 %v965
        %v1039 = vpop.f32.mrf.mxu0
        %v1040 = vadd.f32 0.0, %v1039
        %v1041 = vpop.f32.mrf.mxu0
        %1042 = vmatprep.mubr.f32.mxu0 0.0
        %1043 = vmatmul.mubr.f32.gmra.mxu0 %v968
        %v1044 = vpop.f32.mrf.mxu0
        %v1045 = vadd.f32 0.0, %v1044
        %v1046 = vpop.f32.mrf.mxu0
        %1047 = vdwg.mxu0
        %1049 = vset.pattern.permute.xlu0 16
        %1050 = vperm.xlu0 %1049, %v421
        %v1051 = vpop.permute.xlu0 %1050
        %1054 = vset.pattern.permute.xlu0 16
        %1055 = vperm.xlu0 %1054, %v422
        %v1056 = vpop.permute.xlu0 %1055
        %v1058 = vsel %vm433, %v421, 0
        %v1060 = vsel %vm433, %v422, 0
        %1062 = vmatprep.subr.mxu0 0.0
        %1063 = vmatpush1.msra.mxu0 0.0
        %1064 = vmatprep.subr.mxu0 0.0
        %1065 = vmatpush1.msra.mxu0 0.0
        %1066 = vmatprep.subr.mxu0 0.0
        %1067 = vmatpush1.msra.mxu0 0.0
        %1068 = vmatprep.subr.mxu0 0.0
        %1069 = vmatpush1.msra.mxu0 0.0
        %1070 = vmatprep.subr.mxu0 0.0
        %1071 = vmatpush1.msra.mxu0 0.0
        %1072 = vmatprep.subr.mxu0 0.0
        %1073 = vmatpush1.msra.mxu0 0.0
        %1074 = vmatprep.subr.mxu0 0.0
        %1075 = vmatpush1.msra.mxu0 0.0
        %1076 = vmatprep.subr.mxu0 0.0
        %1077 = vmatpush1.msra.mxu0 0.0
        %1078 = vmatprep.subr.mxu0 0.0
        %1079 = vmatpush1.msra.mxu0 0.0
        %1080 = vmatprep.subr.mxu0 0.0
        %1081 = vmatpush1.msra.mxu0 0.0
        %1082 = vmatprep.subr.mxu0 0.0
        %1083 = vmatpush1.msra.mxu0 0.0
        %1084 = vmatprep.subr.mxu0 0.0
        %1085 = vmatpush1.msra.mxu0 0.0
        %1086 = vmatprep.subr.mxu0 0.0
        %1087 = vmatpush1.msra.mxu0 0.0
        %1088 = vmatprep.subr.mxu0 0.0
        %1089 = vmatpush1.msra.mxu0 0.0
        %1090 = vmatprep.subr.mxu0 0.0
        %1091 = vmatpush1.msra.mxu0 %v241
        %1092 = vmatprep.subr.mxu0 0.0
        %1093 = vmatpush1.msra.mxu0 %v240
        %1094 = vmatprep.subr.mxu0 0.0
        %1095 = vmatpush2.msra.mxu0 0.0
        %1096 = vmatprep.subr.mxu0 0.0
        %1097 = vmatpush2.msra.mxu0 0.0
        %1098 = vmatprep.subr.mxu0 0.0
        %1099 = vmatpush2.msra.mxu0 0.0
        %1100 = vmatprep.subr.mxu0 0.0
        %1101 = vmatpush2.msra.mxu0 0.0
        %1102 = vmatprep.subr.mxu0 0.0
        %1103 = vmatpush2.msra.mxu0 0.0
        %1104 = vmatprep.subr.mxu0 0.0
        %1105 = vmatpush2.msra.mxu0 0.0
        %1106 = vmatprep.subr.mxu0 0.0
        %1107 = vmatpush2.msra.mxu0 0.0
        %1108 = vmatprep.subr.mxu0 0.0
        %1109 = vmatpush2.msra.mxu0 0.0
        %1110 = vmatprep.subr.mxu0 0.0
        %1111 = vmatpush2.msra.mxu0 0.0
        %1112 = vmatprep.subr.mxu0 0.0
        %1113 = vmatpush2.msra.mxu0 0.0
        %1114 = vmatprep.subr.mxu0 0.0
        %1115 = vmatpush2.msra.mxu0 0.0
        %1116 = vmatprep.subr.mxu0 0.0
        %1117 = vmatpush2.msra.mxu0 0.0
        %1118 = vmatprep.subr.mxu0 0.0
        %1119 = vmatpush2.msra.mxu0 0.0
        %1120 = vmatprep.subr.mxu0 0.0
        %1121 = vmatpush2.msra.mxu0 0.0
        %1122 = vmatprep.subr.mxu0 0.0
        %1123 = vmatpush2.msra.mxu0 0.0
        %1124 = vmatprep.subr.mxu0 0.0
        %1125 = vmatpush2.msra.mxu0 0.0
        %1126 = vmatprep.mubr.f32.mxu0 0.0
        %1127 = vmatmul.mubr.f32.gmra.mxu0 %v1058
        %v1128 = vpop.f32.mrf.mxu0
        %v1129 = vadd.f32 %v1051, %v1128
        %v1130 = vpop.f32.mrf.mxu0
        %1131 = vmatprep.mubr.f32.mxu0 0.0
        %1132 = vmatmul.mubr.f32.gmra.mxu0 %v1060
        %v1133 = vpop.f32.mrf.mxu0
        %v1134 = vadd.f32 %v1056, %v1133
        %v1135 = vpop.f32.mrf.mxu0
        %1136 = vdwg.mxu0
        %1137 = vmatprep.subr.mxu0 0.0
        %1138 = vmatpush1.msra.mxu0 0.0
        %1139 = vmatprep.subr.mxu0 0.0
        %1140 = vmatpush1.msra.mxu0 0.0
        %1141 = vmatprep.subr.mxu0 0.0
        %1142 = vmatpush1.msra.mxu0 0.0
        %1143 = vmatprep.subr.mxu0 0.0
        %1144 = vmatpush1.msra.mxu0 0.0
        %1145 = vmatprep.subr.mxu0 0.0
        %1146 = vmatpush1.msra.mxu0 0.0
        %1147 = vmatprep.subr.mxu0 0.0
        %1148 = vmatpush1.msra.mxu0 0.0
        %1149 = vmatprep.subr.mxu0 0.0
        %1150 = vmatpush1.msra.mxu0 0.0
        %1151 = vmatprep.subr.mxu0 0.0
        %1152 = vmatpush1.msra.mxu0 0.0
        %1153 = vmatprep.subr.mxu0 0.0
        %1154 = vmatpush1.msra.mxu0 0.0
        %1155 = vmatprep.subr.mxu0 0.0
        %1156 = vmatpush1.msra.mxu0 0.0
        %1157 = vmatprep.subr.mxu0 0.0
        %1158 = vmatpush1.msra.mxu0 0.0
        %1159 = vmatprep.subr.mxu0 0.0
        %1160 = vmatpush1.msra.mxu0 0.0
        %1161 = vmatprep.subr.mxu0 0.0
        %1162 = vmatpush1.msra.mxu0 0.0
        %1163 = vmatprep.subr.mxu0 0.0
        %1164 = vmatpush1.msra.mxu0 0.0
        %1165 = vmatprep.subr.mxu0 0.0
        %1166 = vmatpush1.msra.mxu0 %v1045
        %1167 = vmatprep.subr.mxu0 0.0
        %1168 = vmatpush1.msra.mxu0 %v1040
        %1169 = vmatprep.subr.mxu0 0.0
        %1170 = vmatpush2.msra.mxu0 0.0
        %1171 = vmatprep.subr.mxu0 0.0
        %1172 = vmatpush2.msra.mxu0 0.0
        %1173 = vmatprep.subr.mxu0 0.0
        %1174 = vmatpush2.msra.mxu0 0.0
        %1175 = vmatprep.subr.mxu0 0.0
        %1176 = vmatpush2.msra.mxu0 0.0
        %1177 = vmatprep.subr.mxu0 0.0
        %1178 = vmatpush2.msra.mxu0 0.0
        %1179 = vmatprep.subr.mxu0 0.0
        %1180 = vmatpush2.msra.mxu0 0.0
        %1181 = vmatprep.subr.mxu0 0.0
        %1182 = vmatpush2.msra.mxu0 0.0
        %1183 = vmatprep.subr.mxu0 0.0
        %1184 = vmatpush2.msra.mxu0 0.0
        %1185 = vmatprep.subr.mxu0 0.0
        %1186 = vmatpush2.msra.mxu0 0.0
        %1187 = vmatprep.subr.mxu0 0.0
        %1188 = vmatpush2.msra.mxu0 0.0
        %1189 = vmatprep.subr.mxu0 0.0
        %1190 = vmatpush2.msra.mxu0 0.0
        %1191 = vmatprep.subr.mxu0 0.0
        %1192 = vmatpush2.msra.mxu0 0.0
        %1193 = vmatprep.subr.mxu0 0.0
        %1194 = vmatpush2.msra.mxu0 0.0
        %1195 = vmatprep.subr.mxu0 0.0
        %1196 = vmatpush2.msra.mxu0 0.0
        %1197 = vmatprep.subr.mxu0 0.0
        %1198 = vmatpush2.msra.mxu0 0.0
        %1199 = vmatprep.subr.mxu0 0.0
        %1200 = vmatpush2.msra.mxu0 0.0
        %1201 = vmatprep.mubr.f32.mxu0 0.0
        %1202 = vmatmul.mubr.f32.gmra.mxu0 %v1058
        %v1203 = vpop.f32.mrf.mxu0
        %v1204 = vadd.f32 0.0, %v1203
        %v1205 = vpop.f32.mrf.mxu0
        %1206 = vmatprep.mubr.f32.mxu0 0.0
        %1207 = vmatmul.mubr.f32.gmra.mxu0 %v1060
        %v1208 = vpop.f32.mrf.mxu0
        %v1209 = vadd.f32 0.0, %v1208
        %v1210 = vpop.f32.mrf.mxu0
        %1211 = vdwg.mxu0
        %1212 = vrot.lane.b32.xlu0 %v414, 64
        %v1213 = vpop.permute.xlu0 %1212
        %v1214 = vsel %vm433, %v1213, 0
        %1216 = vmatprep.subr.mxu0 0.0
        %1217 = vmatpush1.msra.mxu0 0.0
        %1218 = vmatprep.subr.mxu0 0.0
        %1219 = vmatpush1.msra.mxu0 0.0
        %1220 = vmatprep.subr.mxu0 0.0
        %1221 = vmatpush1.msra.mxu0 0.0
        %1222 = vmatprep.subr.mxu0 0.0
        %1223 = vmatpush1.msra.mxu0 0.0
        %1224 = vmatprep.subr.mxu0 0.0
        %1225 = vmatpush1.msra.mxu0 0.0
        %1226 = vmatprep.subr.mxu0 0.0
        %1227 = vmatpush1.msra.mxu0 0.0
        %1228 = vmatprep.subr.mxu0 0.0
        %1229 = vmatpush1.msra.mxu0 0.0
        %1230 = vmatprep.subr.mxu0 0.0
        %1231 = vmatpush1.msra.mxu0 0.0
        %1232 = vmatprep.subr.mxu0 0.0
        %1233 = vmatpush1.msra.mxu0 0.0
        %1234 = vmatprep.subr.mxu0 0.0
        %1235 = vmatpush1.msra.mxu0 0.0
        %1236 = vmatprep.subr.mxu0 0.0
        %1237 = vmatpush1.msra.mxu0 0.0
        %1238 = vmatprep.subr.mxu0 0.0
        %1239 = vmatpush1.msra.mxu0 0.0
        %1240 = vmatprep.subr.mxu0 0.0
        %1241 = vmatpush1.msra.mxu0 0.0
        %1242 = vmatprep.subr.mxu0 0.0
        %1243 = vmatpush1.msra.mxu0 0.0
        %1244 = vmatprep.subr.mxu0 0.0
        %1245 = vmatpush1.msra.mxu0 %v1209
        %1246 = vmatprep.subr.mxu0 0.0
        %1247 = vmatpush1.msra.mxu0 %v1204
        %1248 = vmatprep.subr.mxu0 0.0
        %1249 = vmatpush2.msra.mxu0 0.0
        %1250 = vmatprep.subr.mxu0 0.0
        %1251 = vmatpush2.msra.mxu0 0.0
        %1252 = vmatprep.subr.mxu0 0.0
        %1253 = vmatpush2.msra.mxu0 0.0
        %1254 = vmatprep.subr.mxu0 0.0
        %1255 = vmatpush2.msra.mxu0 0.0
        %1256 = vmatprep.subr.mxu0 0.0
        %1257 = vmatpush2.msra.mxu0 0.0
        %1258 = vmatprep.subr.mxu0 0.0
        %1259 = vmatpush2.msra.mxu0 0.0
        %1260 = vmatprep.subr.mxu0 0.0
        %1261 = vmatpush2.msra.mxu0 0.0
        %1262 = vmatprep.subr.mxu0 0.0
        %1263 = vmatpush2.msra.mxu0 0.0
        %1264 = vmatprep.subr.mxu0 0.0
        %1265 = vmatpush2.msra.mxu0 0.0
        %1266 = vmatprep.subr.mxu0 0.0
        %1267 = vmatpush2.msra.mxu0 0.0
        %1268 = vmatprep.subr.mxu0 0.0
        %1269 = vmatpush2.msra.mxu0 0.0
        %1270 = vmatprep.subr.mxu0 0.0
        %1271 = vmatpush2.msra.mxu0 0.0
        %1272 = vmatprep.subr.mxu0 0.0
        %1273 = vmatpush2.msra.mxu0 0.0
        %1274 = vmatprep.subr.mxu0 0.0
        %1275 = vmatpush2.msra.mxu0 0.0
        %1276 = vmatprep.subr.mxu0 0.0
        %1277 = vmatpush2.msra.mxu0 0.0
        %1278 = vmatprep.subr.mxu0 0.0
        %1279 = vmatpush2.msra.mxu0 0.0
        %1280 = vmatprep.mubr.f32.mxu0 0.0
        %1281 = vmatmul.mubr.f32.gmra.mxu0 %v1214
        %v1282 = vpop.f32.mrf.mxu0
        %v1283 = vadd.f32 0.0, %v1282
        %v1284 = vpop.f32.mrf.mxu0
        %1285 = vdwg.mxu0
        %1287 = vrot.lane.b32.xlu0 %v1283, 8
        %v1288 = vpop.permute.xlu0 %1287
        %1290 = vrot.lane.b32.xlu0 %v1283, 16
        %v1291 = vpop.permute.xlu0 %1290
        %1293 = vrot.lane.b32.xlu0 %v1283, 24
        %v1294 = vpop.permute.xlu0 %1293
        %1296 = vrot.lane.b32.xlu0 %v1283, 32
        %v1297 = vpop.permute.xlu0 %1296
        %1299 = vrot.lane.b32.xlu0 %v1283, 40
        %v1300 = vpop.permute.xlu0 %1299
        %1302 = vrot.lane.b32.xlu0 %v1283, 48
        %v1303 = vpop.permute.xlu0 %1302
        %1305 = vrot.lane.b32.xlu0 %v1283, 56
        %v1306 = vpop.permute.xlu0 %1305
        %v1308 = vsel %vm727, %v1283, %v1288
        %v1309 = vsel %vm433, %v1308, %v1291
        %vm1310 = vcmask 195584
        %v1311 = vsel %vm1310, %v1309, %v1294
        %vm1312 = vcmask 261120
        %v1313 = vsel %vm1312, %v1311, %v1297
        %vm1314 = vcmask 326656
        %v1315 = vsel %vm1314, %v1313, %v1300
        %vm1316 = vcmask 392192
        %v1317 = vsel %vm1316, %v1315, %v1303
        %vm1318 = vcmask 457728
        %v1319 = vsel %vm1318, %v1317, %v1306
        %1320 = vmatprep.subr.mxu0 0.0
        %1321 = vmatpush1.msra.mxu0 0.0
        %1322 = vmatprep.subr.mxu0 0.0
        %1323 = vmatpush1.msra.mxu0 0.0
        %1324 = vmatprep.subr.mxu0 0.0
        %1325 = vmatpush1.msra.mxu0 0.0
        %1326 = vmatprep.subr.mxu0 0.0
        %1327 = vmatpush1.msra.mxu0 0.0
        %1328 = vmatprep.subr.mxu0 0.0
        %1329 = vmatpush1.msra.mxu0 0.0
        %1330 = vmatprep.subr.mxu0 0.0
        %1331 = vmatpush1.msra.mxu0 0.0
        %1332 = vmatprep.subr.mxu0 0.0
        %1333 = vmatpush1.msra.mxu0 0.0
        %1334 = vmatprep.subr.mxu0 0.0
        %1335 = vmatpush1.msra.mxu0 0.0
        %1336 = vmatprep.subr.mxu0 0.0
        %1337 = vmatpush1.msra.mxu0 0.0
        %1338 = vmatprep.subr.mxu0 0.0
        %1339 = vmatpush1.msra.mxu0 0.0
        %1340 = vmatprep.subr.mxu0 0.0
        %1341 = vmatpush1.msra.mxu0 0.0
        %1342 = vmatprep.subr.mxu0 0.0
        %1343 = vmatpush1.msra.mxu0 0.0
        %1344 = vmatprep.subr.mxu0 0.0
        %1345 = vmatpush1.msra.mxu0 0.0
        %1346 = vmatprep.subr.mxu0 0.0
        %1347 = vmatpush1.msra.mxu0 0.0
        %1348 = vmatprep.subr.mxu0 0.0
        %1349 = vmatpush1.msra.mxu0 %v1134
        %1350 = vmatprep.subr.mxu0 0.0
        %1351 = vmatpush1.msra.mxu0 %v1129
        %1352 = vmatprep.subr.mxu0 0.0
        %1353 = vmatpush2.msra.mxu0 0.0
        %1354 = vmatprep.subr.mxu0 0.0
        %1355 = vmatpush2.msra.mxu0 0.0
        %1356 = vmatprep.subr.mxu0 0.0
        %1357 = vmatpush2.msra.mxu0 0.0
        %1358 = vmatprep.subr.mxu0 0.0
        %1359 = vmatpush2.msra.mxu0 0.0
        %1360 = vmatprep.subr.mxu0 0.0
        %1361 = vmatpush2.msra.mxu0 0.0
        %1362 = vmatprep.subr.mxu0 0.0
        %1363 = vmatpush2.msra.mxu0 0.0
        %1364 = vmatprep.subr.mxu0 0.0
        %1365 = vmatpush2.msra.mxu0 0.0
        %1366 = vmatprep.subr.mxu0 0.0
        %1367 = vmatpush2.msra.mxu0 0.0
        %1368 = vmatprep.subr.mxu0 0.0
        %1369 = vmatpush2.msra.mxu0 0.0
        %1370 = vmatprep.subr.mxu0 0.0
        %1371 = vmatpush2.msra.mxu0 0.0
        %1372 = vmatprep.subr.mxu0 0.0
        %1373 = vmatpush2.msra.mxu0 0.0
        %1374 = vmatprep.subr.mxu0 0.0
        %1375 = vmatpush2.msra.mxu0 0.0
        %1376 = vmatprep.subr.mxu0 0.0
        %1377 = vmatpush2.msra.mxu0 0.0
        %1378 = vmatprep.subr.mxu0 0.0
        %1379 = vmatpush2.msra.mxu0 0.0
        %1380 = vmatprep.subr.mxu0 0.0
        %1381 = vmatpush2.msra.mxu0 0.0
        %1382 = vmatprep.subr.mxu0 0.0
        %1383 = vmatpush2.msra.mxu0 0.0
        %1384 = vmatprep.mubr.f32.mxu0 0.0
        %1385 = vmatmul.mubr.f32.gmra.mxu0 %v1214
        %v1386 = vpop.f32.mrf.mxu0
        %v1387 = vadd.f32 %v1319, %v1386
        %v1388 = vpop.f32.mrf.mxu0
        %1389 = vdwg.mxu0
        %vm1390 = vcmask 521216
        %v1391 = vsel %vm1390, %v1387, -inf
        %v1392 = vrot.slane %v1391, 4
        %v1393 = vmax.f32 %v1391, %v1392
        %v1394 = vrot.slane %v1393, 2
        %v1395 = vmax.f32 %v1393, %v1394
        %v1396 = vrot.slane %v1395, 1
        %v1397 = vmax.f32 %v1395, %v1396
        %v1398 = vsub.f32 %v1387, %v1397
        %v1399 = vmul.f32 %v1398, 1.442695
        %v1400 = vpow.pop %v1399
        %v1401 = vsel %vm1390, %v1400, 0.0
        %v1402 = vrot.slane %v1401, 4
        %v1403 = vadd.f32 %v1401, %v1402
        %v1404 = vrot.slane %v1403, 2
        %v1405 = vadd.f32 %v1403, %v1404
        %v1406 = vrot.slane %v1405, 1
        %v1407 = vadd.f32 %v1405, %v1406
        %v1408 = vrcp.pop %v1407
        %v1409 = vmul.f32 %v1400, %v1408
        %1410 = vrot.lane.b32.xlu0 %v414, 48
        %v1411 = vpop.permute.xlu0 %1410
        %1413 = vxpose.xlu0.b32.start [1/16] %v1411, 128
        %1414 = vxpose.xlu0.b32.cont [2/16] 0.0, 128
        %1415 = vxpose.xlu0.b32.cont [3/16] 0.0, 128
        %1416 = vxpose.xlu0.b32.cont [4/16] 0.0, 128
        %1417 = vxpose.xlu0.b32.cont [5/16] 0.0, 128
        %1418 = vxpose.xlu0.b32.cont [6/16] 0.0, 128
        %1419 = vxpose.xlu0.b32.cont [7/16] 0.0, 128
        %1420 = vxpose.xlu0.b32.cont [8/16] 0.0, 128
        %1421 = vxpose.xlu0.b32.cont [9/16] 0.0, 128
        %1422 = vxpose.xlu0.b32.cont [10/16] 0.0, 128
        %1423 = vxpose.xlu0.b32.cont [11/16] 0.0, 128
        %1424 = vxpose.xlu0.b32.cont [12/16] 0.0, 128
        %1425 = vxpose.xlu0.b32.cont [13/16] 0.0, 128
        %1426 = vxpose.xlu0.b32.cont [14/16] 0.0, 128
        %1427 = vxpose.xlu0.b32.cont [15/16] 0.0, 128
        %1428 = vxpose.xlu0.b32.end [16/16] 0.0, 128
        %v1429 = vpop.trf.xlu0
        %v1430 = vpop.trf.xlu0
        %v1431 = vpop.trf.xlu0
        %v1432 = vpop.trf.xlu0
        %v1433 = vpop.trf.xlu0
        %v1434 = vpop.trf.xlu0
        %v1435 = vpop.trf.xlu0
        %v1436 = vpop.trf.xlu0
        %v1437 = vpop.trf.xlu0
        %v1438 = vpop.trf.xlu0
        %v1439 = vpop.trf.xlu0
        %v1440 = vpop.trf.xlu0
        %v1441 = vpop.trf.xlu0
        %v1442 = vpop.trf.xlu0
        %v1443 = vpop.trf.xlu0
        %v1444 = vpop.trf.xlu0
        %v1446 = vsel %vm641, %v1429, 0
        %v1449 = vsel %vm641, %v1430, 0
        %v1452 = vsel %vm648, %v1409, 0
        %1454 = vmatprep.subr.mxu0 0.0
        %1455 = vmatpush1.msra.mxu0 0.0
        %1456 = vmatprep.subr.mxu0 0.0
        %1457 = vmatpush1.msra.mxu0 0.0
        %1458 = vmatprep.subr.mxu0 0.0
        %1459 = vmatpush1.msra.mxu0 0.0
        %1460 = vmatprep.subr.mxu0 0.0
        %1461 = vmatpush1.msra.mxu0 0.0
        %1462 = vmatprep.subr.mxu0 0.0
        %1463 = vmatpush1.msra.mxu0 0.0
        %1464 = vmatprep.subr.mxu0 0.0
        %1465 = vmatpush1.msra.mxu0 0.0
        %1466 = vmatprep.subr.mxu0 0.0
        %1467 = vmatpush1.msra.mxu0 0.0
        %1468 = vmatprep.subr.mxu0 0.0
        %1469 = vmatpush1.msra.mxu0 0.0
        %1470 = vmatprep.subr.mxu0 0.0
        %1471 = vmatpush1.msra.mxu0 0.0
        %1472 = vmatprep.subr.mxu0 0.0
        %1473 = vmatpush1.msra.mxu0 0.0
        %1474 = vmatprep.subr.mxu0 0.0
        %1475 = vmatpush1.msra.mxu0 0.0
        %1476 = vmatprep.subr.mxu0 0.0
        %1477 = vmatpush1.msra.mxu0 0.0
        %1478 = vmatprep.subr.mxu0 0.0
        %1479 = vmatpush1.msra.mxu0 0.0
        %1480 = vmatprep.subr.mxu0 0.0
        %1481 = vmatpush1.msra.mxu0 0.0
        %1482 = vmatprep.subr.mxu0 0.0
        %1483 = vmatpush1.msra.mxu0 0.0
        %1484 = vmatprep.subr.mxu0 0.0
        %1485 = vmatpush1.msra.mxu0 %v1452
        %1486 = vmatprep.subr.mxu0 0.0
        %1487 = vmatpush2.msra.mxu0 0.0
        %1488 = vmatprep.subr.mxu0 0.0
        %1489 = vmatpush2.msra.mxu0 0.0
        %1490 = vmatprep.subr.mxu0 0.0
        %1491 = vmatpush2.msra.mxu0 0.0
        %1492 = vmatprep.subr.mxu0 0.0
        %1493 = vmatpush2.msra.mxu0 0.0
        %1494 = vmatprep.subr.mxu0 0.0
        %1495 = vmatpush2.msra.mxu0 0.0
        %1496 = vmatprep.subr.mxu0 0.0
        %1497 = vmatpush2.msra.mxu0 0.0
        %1498 = vmatprep.subr.mxu0 0.0
        %1499 = vmatpush2.msra.mxu0 0.0
        %1500 = vmatprep.subr.mxu0 0.0
        %1501 = vmatpush2.msra.mxu0 0.0
        %1502 = vmatprep.subr.mxu0 0.0
        %1503 = vmatpush2.msra.mxu0 0.0
        %1504 = vmatprep.subr.mxu0 0.0
        %1505 = vmatpush2.msra.mxu0 0.0
        %1506 = vmatprep.subr.mxu0 0.0
        %1507 = vmatpush2.msra.mxu0 0.0
        %1508 = vmatprep.subr.mxu0 0.0
        %1509 = vmatpush2.msra.mxu0 0.0
        %1510 = vmatprep.subr.mxu0 0.0
        %1511 = vmatpush2.msra.mxu0 0.0
        %1512 = vmatprep.subr.mxu0 0.0
        %1513 = vmatpush2.msra.mxu0 0.0
        %1514 = vmatprep.subr.mxu0 0.0
        %1515 = vmatpush2.msra.mxu0 0.0
        %1516 = vmatprep.subr.mxu0 0.0
        %1517 = vmatpush2.msra.mxu0 0.0
        %1518 = vmatprep.mubr.f32.mxu0 0.0
        %1519 = vmatmul.mubr.f32.gmra.mxu0 %v1446
        %v1520 = vpop.f32.mrf.mxu0
        %v1521 = vadd.f32 0.0, %v1520
        %v1522 = vpop.f32.mrf.mxu0
        %1523 = vmatprep.mubr.f32.mxu0 0.0
        %1524 = vmatmul.mubr.f32.gmra.mxu0 %v1449
        %v1525 = vpop.f32.mrf.mxu0
        %v1526 = vadd.f32 0.0, %v1525
        %v1527 = vpop.f32.mrf.mxu0
        %1528 = vdwg.mxu0
        %v1529 = vadd.f32 %v240, %v1521
        %v1530 = vadd.f32 %v241, %v1526
        %1531 = vst.msk [vmem:[%s230] sm:$0xff] %vm250, %v1529
        %1532 = vst.msk [vmem:[%s230 + $0x8] sm:$0xff] %vm250, %v1530
        %s1533 = sand.u32 %s142, 1
        %s1534 = scalar_lea.sflag [#allocation3], %s1533
        %s1535 = sand.u32 %s142, 1
        %s1536 = smul.addr %s1535, 16
        %s1537 = scalar_lea.vmem [#allocation2], %s1536
        // Predicated region
        $region41: #{tpu_custom_call.1} parent=39 // pred_check
          %p1538 = pneg %p152
        $region42: #{tpu_custom_call.1} parent=39 // pred_check_branch
          %1540 = sbr.rel (%p1538) target = $region44
        $region43: #{tpu_custom_call.1} parent=39 // pred_region
          %s1542 = ssub.s32 256, 256
          %1543 = vsyncadd %s1534, %s1542
          %s1544 = smul.addr %s19, 2
          %s1545 = smul.addr %s1544, 128
          %s1546 = scalar_lea.hbm %s5, %s1545
          %s1547 = sshll.u32 %s1537, 4
          %s1548 = int_to_ptr.vmem [resolvable:$true] %s1547
          %1553 = dma.vmem_to_hbm [thread:$0]  %s1548, 256, %s1546, %s1534, 128, 128, 8
        $region44: #{tpu_custom_call.1} parent=39 // pred_fallthru
          _
      $region40: #{tpu_custom_call.1} parent=5 // pred_fallthru
        _
      %p1554 = scmp.le.s32.totalorder 2, %s14
      // Predicated region
      $region45: #{tpu_custom_call.1} parent=5 // pred_check
        %p1555 = pneg %p1554
      $region46: #{tpu_custom_call.1} parent=5 // pred_check_branch
        %1557 = sbr.rel (%p1555) target = $region48
      $region47: #{tpu_custom_call.1} parent=5 // pred_region
        %s1558 = ssub.s32 %s14, 2
        // Predicated region
        $region49: #{tpu_custom_call.1} parent=47 // pred_check
          %p1559 = pneg %p158
        $region50: #{tpu_custom_call.1} parent=47 // pred_check_branch
          %1561 = sbr.rel (%p1559) target = $region52
        $region51: #{tpu_custom_call.1} parent=47 // pred_region
          %s1562 = sand.u32 %s143, 1
          %s1563 = scalar_lea.sflag [#allocation3], %s1562
          %s1564 = sand.u32 %s143, 1
          %s1565 = smul.addr %s1564, 16
          %s1566 = scalar_lea.vmem [#allocation2], %s1565
          %1567 = dma.done %s1563, 256
        $region52: #{tpu_custom_call.1} parent=47 // pred_fallthru
          _
      $region48: #{tpu_custom_call.1} parent=5 // pred_fallthru
        _
    $region6: #{tpu_custom_call.1} parent=1 // loop_footer
      %s18 = sadd.s32 1, %s14
    $region7: #{tpu_custom_call.1} parent=1 // loop_footer_branch
      %13 = sbr.rel target = $region3
    $region8: #{tpu_custom_call.1} parent=1 // loop_exit
      _
    %1568 = vsyncpa [#allocation3], 1
    %s1569 = scalar_lea.sflag [#allocation3], 1
    %1570 = vsyncpa %s1569, 1

</llo_original>
